<compile_context>
chip_gen: v5e
topology: v5e:2x2
jax: 0.10.0
libtpu: 0.0.40
codegen_flags: <defaults>
</compile_context>

<pallas_src>
import functools

import jax
import jax.numpy as jnp
import numpy as np
from jax.experimental import pallas as pl
from jax.experimental.pallas import tpu as pltpu

EPS = 1e-5
# Per-step working set is a few hundred KiB; 32 MiB is comfortably inside every
# generation's budget (v7x physical VMEM is 64 MiB).
VMEM_LIMIT_BYTES = 32 * 1024 * 1024


# ---------------------------------------------------------------------------
# Small static helpers (shape-derived, evaluated at trace time)
# ---------------------------------------------------------------------------
def _row_group(H, wc):
    """Rows folded into lanes so the lane width R*W*C reaches 128."""
    if wc >= 128:
        return 1
    for r in range(1, H + 1):
        if H % r == 0 and r * wc >= 128:
            return r
    return H


def _choose_nb(N, rows_per_image, target_rows):
    """Images per grid step: fill ~target_rows matmul rows, keep >= 2 grid
    steps (both v7x TensorCores) when the batch allows, divide N evenly."""
    nb = max(1, min(N, target_rows // max(rows_per_image, 1)))
    while N % nb:
        nb -= 1
    if N >= 2 and N // nb < 2:
        nb = max(1, nb // 2)
        while N % nb:
            nb -= 1
    return nb


# ---------------------------------------------------------------------------
# Kernels
# ---------------------------------------------------------------------------
def _conv_kernel(*refs, apply_bn, apply_relu):
    """[optional fused BN+ReLU] -> 3x3 conv (one fused banded matmul) -> stats.

    refs (apply_bn=True ): scale, shift, x, w, out, stats
    refs (apply_bn=False):               x, w, out, stats
      scale/shift : (1, Li)        folded BN affine of the previous BN
      x           : (NB, H2, Li)   activation slab, lanes = (row-in-group, w, c)
      w           : (3*Li, Lo)     fused banded bf16 weights (prev|cur|next taps)
      out         : (NB, H2, Lo)   raw conv output, bf16
      stats       : (1, 2, Lo)     per-lane (sum, sumsq) over the block rows
    """
    if apply_bn:
        scale_ref, shift_ref, x_ref, w_ref, out_ref, stat_ref = refs
    else:
        x_ref, w_ref, out_ref, stat_ref = refs

    NB, H2, Li = x_ref.shape
    Lo = w_ref.shape[-1]
    M = NB * H2

    # Previous-stage BN affine (+ ReLU), lane-dense FMA in f32.
    x = x_ref[...].reshape(M, Li).astype(jnp.float32)
    if apply_bn:
        x = x * scale_ref[...] + shift_ref[...]
    if apply_relu:
        x = jnp.maximum(x, 0.0)

    # H halo: neighbouring row-groups via sublane roll; the top/bottom group of
    # every image is zero-masked (covers the roll wraparound and the rows that
    # belong to a different image when NB > 1).
    rr = jax.lax.broadcasted_iota(jnp.int32, (M, Li), 0) % H2
    prev = jnp.where(rr > 0, pltpu.roll(x, 1, axis=0), 0.0)
    nxt = jnp.where(rr < H2 - 1, pltpu.roll(x, M - 1, axis=0), 0.0)

    # Single fused-tap banded matmul: (M, 3*Li) bf16 @ (3*Li, Lo) bf16 -> f32.
    # kw taps and W zero padding are encoded in the band matrix.
    x3 = jnp.concatenate([prev, x, nxt], axis=-1).astype(jnp.bfloat16)
    acc = jnp.dot(x3, w_ref[...], preferred_element_type=jnp.float32)

    # Per-lane partial BN statistics, packed into one small output.
    s = jnp.sum(acc, axis=0, keepdims=True)
    q = jnp.sum(acc * acc, axis=0, keepdims=True)
    stat_ref[...] = jnp.concatenate([s, q], axis=0).reshape(1, 2, Lo)

    # bf16 writeback of the raw (pre-BN) conv output, 128-lane dense.
    out_ref[...] = acc.astype(jnp.bfloat16).reshape(NB, H2, Lo)


def _bn_residual_kernel(scale_ref, shift_ref, c_ref, x_ref, y_ref):
    """y = ReLU(BN2(conv2) + x), lane-dense elementwise pass."""
    L = c_ref.shape[-1]
    scale = scale_ref[...].reshape(1, 1, L)
    shift = shift_ref[...].reshape(1, 1, L)
    y = c_ref[...].astype(jnp.float32) * scale + shift + x_ref[...]
    y_ref[...] = jnp.maximum(y, 0.0)


# ---------------------------------------------------------------------------
# pallas_call wrappers
# ---------------------------------------------------------------------------
def _conv_call(x_slab, w_fused, scale=None, shift=None, *, apply_relu):
    N, H2, Li = x_slab.shape
    K3, Lo = w_fused.shape
    apply_bn = scale is not None
    NB = _choose_nb(N, H2, target_rows=256)     # ~256 MXU rows (v6e/v7x target)
    G = N // NB

    in_specs, args = [], []
    if apply_bn:
        in_specs += [pl.BlockSpec((1, Li), lambda g: (0, 0)),
                     pl.BlockSpec((1, Li), lambda g: (0, 0))]
        args += [scale, shift]
    in_specs += [pl.BlockSpec((NB, H2, Li), lambda g: (g, 0, 0)),
                 pl.BlockSpec((K3, Lo), lambda g: (0, 0))]
    args += [x_slab, w_fused]

    kernel = functools.partial(_conv_kernel, apply_bn=apply_bn,
                               apply_relu=apply_relu)
    grid_spec = pltpu.PrefetchScalarGridSpec(
        num_scalar_prefetch=0,
        grid=(G,),
        in_specs=in_specs,
        out_specs=(
            pl.BlockSpec((NB, H2, Lo), lambda g: (g, 0, 0)),   # conv output
            pl.BlockSpec((1, 2, Lo), lambda g: (g, 0, 0)),     # packed stats
        ),
    )
    return pl.pallas_call(
        kernel,
        out_shape=(
            jax.ShapeDtypeStruct((N, H2, Lo), jnp.bfloat16),   # bf16 intermediate
            jax.ShapeDtypeStruct((G, 2, Lo), jnp.float32),
        ),
        grid_spec=grid_spec,
        compiler_params=pltpu.CompilerParams(
            dimension_semantics=("parallel",),
            vmem_limit_bytes=VMEM_LIMIT_BYTES),
    )(*args)


def _bn_residual_call(scale, shift, c_slab, x_slab):
    N, H2, L = x_slab.shape
    NB = _choose_nb(N, H2, target_rows=512)     # pure elementwise, HBM-bound
    G = N // NB
    grid_spec = pltpu.PrefetchScalarGridSpec(
        num_scalar_prefetch=0,
        grid=(G,),
        in_specs=[pl.BlockSpec((1, L), lambda g: (0, 0)),
                  pl.BlockSpec((1, L), lambda g: (0, 0)),
                  pl.BlockSpec((NB, H2, L), lambda g: (g, 0, 0)),
                  pl.BlockSpec((NB, H2, L), lambda g: (g, 0, 0))],
        out_specs=pl.BlockSpec((NB, H2, L), lambda g: (g, 0, 0)),
    )
    return pl.pallas_call(
        _bn_residual_kernel,
        out_shape=jax.ShapeDtypeStruct((N, H2, L), jnp.float32),
        grid_spec=grid_spec,
        compiler_params=pltpu.CompilerParams(
            dimension_semantics=("parallel",),
            vmem_limit_bytes=VMEM_LIMIT_BYTES),
    )(scale, shift, c_slab, x_slab)


# ---------------------------------------------------------------------------
# Host-side helpers (one-time weight packing + tiny BN glue)
# ---------------------------------------------------------------------------
def _band_weights(w_hwio, W, R):
    """(3,3,Ci,Co) HWIO conv weights -> (3*R*W*Ci, R*W*Co) fused banded bf16.

    Row groups of size R are folded into lanes; tap t in {0,1,2} maps the
    previous/current/next row group to the current output group.  The kw taps
    and the W zero padding are encoded by the band structure."""
    w = np.asarray(w_hwio, np.float32)
    KH, KW, Ci, Co = w.shape
    Li, Lo = R * W * Ci, R * W * Co
    T = np.zeros((3, Li, Lo), np.float32)
    for p in range(R):                      # output row within the group
        for kh in range(KH):
            r = p + kh - 1                  # input row relative to group start
            t = (r // R) + 1                # 0: prev group, 1: current, 2: next
            q = r - (t - 1) * R             # input row within that group
            for wo in range(W):
                for kw in range(KW):
                    wi = wo + kw - 1
                    if 0 <= wi < W:         # W zero padding folded in
                        T[t,
                          q * W * Ci + wi * Ci:q * W * Ci + (wi + 1) * Ci,
                          p * W * Co + wo * Co:p * W * Co + (wo + 1) * Co] = w[kh, kw]
    return jnp.asarray(T.reshape(3 * Li, Lo)).astype(jnp.bfloat16)


def _fold_bn(stats, count, gamma, beta, reps):
    """Reduce packed per-block (sum, sumsq) partial stats -> folded BN
    scale/shift tiled to the (row-in-group, w, c) lane layout."""
    C = gamma.shape[0]
    s = jnp.sum(stats[:, 0, :].reshape(-1, C), axis=0)
    q = jnp.sum(stats[:, 1, :].reshape(-1, C), axis=0)
    mean = s / count
    var = q / count - mean * mean           # biased variance (BN normalization)
    scale = gamma * jax.lax.rsqrt(var + EPS)
    shift = beta - mean * scale
    return (jnp.tile(scale, reps).reshape(1, reps * C),
            jnp.tile(shift, reps).reshape(1, reps * C))


def _forward_impl(x_nchw, T1, g1, b1, T2, g2, b2):
    N, C, H, W = x_nchw.shape
    R = _row_group(H, W * C)
    H2 = H // R
    count = N * H * W

    # NCHW -> lane-dense (N, H/R, R*W*C) slab.  TODO(synk): in a full network
    # the slab layout would persist across blocks, removing this transpose pair.
    x_slab = jnp.transpose(x_nchw, (0, 2, 3, 1)).astype(jnp.float32)
    x_slab = x_slab.reshape(N, H2, R * W * C)

    # conv1 (no input BN -> no FMA, no scale/shift DMAs) + partial BN1 stats
    c1, st1 = _conv_call(x_slab, T1, apply_relu=False)
    sc1, sh1 = _fold_bn(st1, count, g1, b1, R * W)

    # BN1 + ReLU (fused FMA) + conv2 + partial BN2 stats
    c2, st2 = _conv_call(c1, T2, sc1, sh1, apply_relu=True)
    sc2, sh2 = _fold_bn(st2, count, g2, b2, R * W)

    # BN2 + identity residual + final ReLU
    y_slab = _bn_residual_call(sc2, sh2, c2, x_slab)
    return jnp.transpose(y_slab.reshape(N, H, W, C), (0, 3, 1, 2))


_forward = jax.jit(_forward_impl)


def xresnet_block(x_nchw, params):
    """x_nchw: (N, C, H, W) float32 (PyTorch layout). Returns NCHW output."""
    w1, g1, b1, w2, g2, b2 = params
    _, Cin, H, W = x_nchw.shape
    assert Cin == g2.shape[0], "identity-skip config (n_inputs == n_filters) only"
    R = _row_group(H, W * Cin)
    # One-time packing of conv weights into fused banded bf16 matrices
    # (analogous to a weight layout transform).
    T1 = _band_weights(w1, W, R)
    T2 = _band_weights(w2, W, R)
    return _forward(x_nchw,
                    T1, g1.astype(jnp.float32), b1.astype(jnp.float32),
                    T2, g2.astype(jnp.float32), b2.astype(jnp.float32))


# ---------------------------------------------------------------------------
# Pure-JAX reference (XLA convs).  It follows the same numerics contract as
# the kernels: bf16 conv inputs/weights with f32 accumulation, and bf16
# storage of the intermediate conv outputs (which the kernel adopts per the
# perf feedback).  BN-with-batch-stats / ReLU / residual semantics are
# identical to the PyTorch module.
# ---------------------------------------------------------------------------
def xresnet_block_reference(x_nchw, params):
    w1, g1, b1, w2, g2, b2 = params
    x = jnp.transpose(x_nchw, (0, 2, 3, 1)).astype(jnp.float32)

    def conv_bf16(h, w):
        out = jax.lax.conv_general_dilated(
            h.astype(jnp.bfloat16), w.astype(jnp.bfloat16),
            window_strides=(1, 1), padding="SAME",
            dimension_numbers=("NHWC", "HWIO", "NHWC"),
            preferred_element_type=jnp.float32)
        # mirror the kernel's bf16 storage of intermediate conv outputs
        return out.astype(jnp.bfloat16).astype(jnp.float32)

    def bn(h, g, b):
        m = jnp.mean(h, axis=(0, 1, 2), keepdims=True)
        v = jnp.mean((h - m) ** 2, axis=(0, 1, 2), keepdims=True)
        return (h - m) * jax.lax.rsqrt(v + EPS) * g.reshape(1, 1, 1, -1) \
            + b.reshape(1, 1, 1, -1)

    h = jnp.maximum(bn(conv_bf16(x, w1), g1, b1), 0.0)
    h = bn(conv_bf16(h, w2), g2, b2)
    out = jnp.maximum(h + x, 0.0)
    return jnp.transpose(out, (0, 3, 1, 2))


if __name__ == "__main__":
    # XResNetBlock(expansion=1, n_inputs=4, n_hidden=4, stride=1)
    #   -> n_inputs = 4, n_hidden = 4, n_filters = 4 (identity skip, no pool)
    N, C, H, W = 2, 4, 16, 16
    Ch = 4

    key = jax.random.PRNGKey(0)
    kx, k1, k2, kg1, kb1, kg2, kb2 = jax.random.split(key, 7)

    x = jax.random.normal(kx, (N, C, H, W), dtype=jnp.float32)

    # conv weights stored HWIO (kh, kw, C_in, C_out)
    w1 = 0.3 * jax.random.normal(k1, (3, 3, C, Ch), dtype=jnp.float32)
    w2 = 0.3 * jax.random.normal(k2, (3, 3, Ch, C), dtype=jnp.float32)
    g1 = 1.0 + 0.1 * jax.random.normal(kg1, (Ch,), dtype=jnp.float32)
    b1 = 0.1 * jax.random.normal(kb1, (Ch,), dtype=jnp.float32)
    g2 = 1.0 + 0.1 * jax.random.normal(kg2, (C,), dtype=jnp.float32)
    b2 = 0.1 * jax.random.normal(kb2, (C,), dtype=jnp.float32)

    params = (w1, g1, b1, w2, g2, b2)

    y = jax.block_until_ready(xresnet_block(x, params))
    y_ref = jax.block_until_ready(xresnet_block_reference(x, params))

    assert y.shape == (N, C, H, W), y.shape
    # Tolerance covers 1-ulp bf16 rounding-boundary differences of the stored
    # intermediates; everything else matches to f32 accumulation order.
    np.testing.assert_allclose(np.asarray(y), np.asarray(y_ref),
                               atol=2e-2, rtol=2e-2)
    print("KERNEL_OK")
</pallas_src>

<mosaic_0001>
module attributes {stable_mosaic.version = 11 : i64} {
  func.func @_conv_kernel(%arg0: i32, %arg1: memref<1x8x128xf32, #tpu.memory_space<vmem>>, %arg2: memref<384x128xbf16, #tpu.memory_space<vmem>>, %arg3: memref<1x8x128xbf16, #tpu.memory_space<vmem>>, %arg4: memref<1x2x128xf32, #tpu.memory_space<vmem>>) attributes {dimension_semantics = [#tpu.dimension_semantics<parallel>], iteration_bounds = array<i64: 2>, scalar_prefetch = 0 : i64, scratch_operands = 0 : i64, tpu.core_type = #tpu.core_type<tc>, window_params = [{transform_indices = @transform_0, window_bounds = array<i64: 1, 8, 128>}, {pipeline_mode = #tpu.pipeline_mode<synchronous>, transform_indices = @transform_1, window_bounds = array<i64: 384, 128>}, {transform_indices = @transform_2, window_bounds = array<i64: 1, 8, 128>}, {transform_indices = @transform_3, window_bounds = array<i64: 1, 2, 128>}]} {
    %c0 = arith.constant 0 : index
    %c0_0 = arith.constant 0 : index
    %c0_1 = arith.constant 0 : index
    %0 = vector.load %arg1[%c0, %c0_0, %c0_1] : memref<1x8x128xf32, #tpu.memory_space<vmem>>, vector<1x8x128xf32>
    %1 = vector.shape_cast %0 : vector<1x8x128xf32> to vector<8x128xf32>
    %2 = tpu.iota {dimensions = array<i32: 0>} : vector<8x128xi32>
    %c8_i32 = arith.constant 8 : i32
    %c0_i32 = arith.constant 0 : i32
    %3 = arith.cmpi eq, %c8_i32, %c0_i32 : i32
    %c1_i32 = arith.constant 1 : i32
    %4 = arith.select %3, %c1_i32, %c8_i32 : i32
    %5 = vector.broadcast %4 : i32 to vector<8x128xi32>
    %6 = arith.remsi %2, %5 : vector<8x128xi32>
    %c0_i32_2 = arith.constant 0 : i32
    %7 = vector.broadcast %c0_i32_2 : i32 to vector<8x128xi32>
    %8 = arith.cmpi ne, %6, %7 : vector<8x128xi32>
    %c0_i32_3 = arith.constant 0 : i32
    %9 = vector.broadcast %c0_i32_3 : i32 to vector<8x128xi32>
    %10 = arith.cmpi slt, %6, %9 : vector<8x128xi32>
    %c0_i32_4 = arith.constant 0 : i32
    %11 = arith.cmpi slt, %4, %c0_i32_4 : i32
    %12 = vector.broadcast %11 : i1 to vector<8x128xi1>
    %13 = vector.broadcast %12 : vector<8x128xi1> to vector<8x128xi1>
    %14 = arith.xori %10, %13 : vector<8x128xi1>
    %15 = arith.andi %14, %8 : vector<8x128xi1>
    %16 = vector.broadcast %4 : i32 to vector<8x128xi32>
    %17 = arith.addi %6, %16 : vector<8x128xi32>
    %18 = arith.select %15, %17, %6 : vector<8x128xi1>, vector<8x128xi32>
    %c0_i32_5 = arith.constant 0 : i32
    %19 = vector.broadcast %c0_i32_5 : i32 to vector<8x128xi32>
    %20 = arith.cmpi sgt, %18, %19 : vector<8x128xi32>
    %c1_i32_6 = arith.constant 1 : i32
    %21 = tpu.dynamic_rotate %1 by %c1_i32_6 dim 0 : vector<8x128xf32>, i32 -> vector<8x128xf32>
    %cst = arith.constant 0.000000e+00 : f32
    %22 = vector.broadcast %cst : f32 to vector<8x128xf32>
    %23 = arith.select %20, %21, %22 : vector<8x128xi1>, vector<8x128xf32>
    %c7_i32 = arith.constant 7 : i32
    %24 = vector.broadcast %c7_i32 : i32 to vector<8x128xi32>
    %25 = arith.cmpi slt, %18, %24 : vector<8x128xi32>
    %c7_i32_7 = arith.constant 7 : i32
    %26 = tpu.dynamic_rotate %1 by %c7_i32_7 dim 0 : vector<8x128xf32>, i32 -> vector<8x128xf32>
    %cst_8 = arith.constant 0.000000e+00 : f32
    %27 = vector.broadcast %cst_8 : f32 to vector<8x128xf32>
    %28 = arith.select %25, %26, %27 : vector<8x128xi1>, vector<8x128xf32>
    %29 = tpu.concatenate %23, %1, %28 in 1 : vector<8x128xf32>, vector<8x128xf32>, vector<8x128xf32> -> vector<8x384xf32>
    %30 = arith.truncf %29 : vector<8x384xf32> to vector<8x384xbf16>
    %c0_9 = arith.constant 0 : index
    %c0_10 = arith.constant 0 : index
    %31 = vector.load %arg2[%c0_9, %c0_10] : memref<384x128xbf16, #tpu.memory_space<vmem>>, vector<384x128xbf16>
    %cst_11 = arith.constant dense<0.000000e+00> : vector<8x128xf32>
    %32 = tpu.matmul %30, %31, %cst_11 {dimension_numbers = #tpu.dot_dimension_numbers<[1], [0], [0], [1], [0, 0, 1, 1], [], []>} : vector<8x384xbf16>, vector<384x128xbf16>, vector<8x128xf32> -> vector<8x128xf32>
    %cst_12 = arith.constant dense<0.000000e+00> : vector<128xf32>
    %33 = vector.multi_reduction <add>, %32, %cst_12 [0] : vector<8x128xf32> to vector<128xf32>
    %34 = vector.shape_cast %33 : vector<128xf32> to vector<1x128xf32>
    %35 = arith.mulf %32, %32 : vector<8x128xf32>
    %cst_13 = arith.constant dense<0.000000e+00> : vector<128xf32>
    %36 = vector.multi_reduction <add>, %35, %cst_13 [0] : vector<8x128xf32> to vector<128xf32>
    %37 = vector.shape_cast %36 : vector<128xf32> to vector<1x128xf32>
    %38 = tpu.concatenate %34, %37 in 0 : vector<1x128xf32>, vector<1x128xf32> -> vector<2x128xf32>
    %39 = vector.shape_cast %38 : vector<2x128xf32> to vector<1x2x128xf32>
    %c0_14 = arith.constant 0 : index
    %c0_15 = arith.constant 0 : index
    %c0_16 = arith.constant 0 : index
    %40 = vector.load %arg4[%c0_14, %c0_15, %c0_16] : memref<1x2x128xf32, #tpu.memory_space<vmem>>, vector<1x2x128xf32>
    tpu.vector_store %arg4[%c0_14, %c0_15, %c0_16], %39 {strides = array<i32>} : memref<1x2x128xf32, #tpu.memory_space<vmem>>, vector<1x2x128xf32>,
    %41 = arith.truncf %32 : vector<8x128xf32> to vector<8x128xbf16>
    %42 = vector.shape_cast %41 : vector<8x128xbf16> to vector<1x8x128xbf16>
    %c0_17 = arith.constant 0 : index
    %c0_18 = arith.constant 0 : index
    %c0_19 = arith.constant 0 : index
    %43 = vector.load %arg3[%c0_17, %c0_18, %c0_19] : memref<1x8x128xbf16, #tpu.memory_space<vmem>>, vector<1x8x128xbf16>
    tpu.vector_store %arg3[%c0_17, %c0_18, %c0_19], %42 {strides = array<i32>} : memref<1x8x128xbf16, #tpu.memory_space<vmem>>, vector<1x8x128xbf16>,
    return
  }
  func.func @transform_0(%arg0: i32) -> (i32, i32, i32) {
    %c0_i32 = arith.constant 0 : i32
    %c0_i32_0 = arith.constant 0 : i32
    %c0_i32_1 = arith.constant 0 : i32
    return %arg0, %c0_i32, %c0_i32_0 : i32, i32, i32
  }
  func.func @transform_1(%arg0: i32) -> (i32, i32) {
    %c0_i32 = arith.constant 0 : i32
    %c0_i32_0 = arith.constant 0 : i32
    %c0_i32_1 = arith.constant 0 : i32
    return %c0_i32, %c0_i32_0 : i32, i32
  }
  func.func @transform_2(%arg0: i32) -> (i32, i32, i32) {
    %c0_i32 = arith.constant 0 : i32
    %c0_i32_0 = arith.constant 0 : i32
    %c0_i32_1 = arith.constant 0 : i32
    return %arg0, %c0_i32, %c0_i32_0 : i32, i32, i32
  }
  func.func @transform_3(%arg0: i32) -> (i32, i32, i32) {
    %c0_i32 = arith.constant 0 : i32
    %c0_i32_0 = arith.constant 0 : i32
    %c0_i32_1 = arith.constant 0 : i32
    return %arg0, %c0_i32, %c0_i32_0 : i32, i32, i32
  }
}

module attributes {stable_mosaic.version = 11 : i64} {
  func.func @_conv_kernel(%arg0: i32, %arg1: memref<1x128xf32, #tpu.memory_space<vmem>>, %arg2: memref<1x128xf32, #tpu.memory_space<vmem>>, %arg3: memref<1x8x128xbf16, #tpu.memory_space<vmem>>, %arg4: memref<384x128xbf16, #tpu.memory_space<vmem>>, %arg5: memref<1x8x128xbf16, #tpu.memory_space<vmem>>, %arg6: memref<1x2x128xf32, #tpu.memory_space<vmem>>) attributes {dimension_semantics = [#tpu.dimension_semantics<parallel>], iteration_bounds = array<i64: 2>, scalar_prefetch = 0 : i64, scratch_operands = 0 : i64, tpu.core_type = #tpu.core_type<tc>, window_params = [{pipeline_mode = #tpu.pipeline_mode<synchronous>, transform_indices = @transform_0, window_bounds = array<i64: 1, 128>}, {pipeline_mode = #tpu.pipeline_mode<synchronous>, transform_indices = @transform_1, window_bounds = array<i64: 1, 128>}, {transform_indices = @transform_2, window_bounds = array<i64: 1, 8, 128>}, {pipeline_mode = #tpu.pipeline_mode<synchronous>, transform_indices = @transform_3, window_bounds = array<i64: 384, 128>}, {transform_indices = @transform_4, window_bounds = array<i64: 1, 8, 128>}, {transform_indices = @transform_5, window_bounds = array<i64: 1, 2, 128>}]} {
    %c0 = arith.constant 0 : index
    %c0_0 = arith.constant 0 : index
    %c0_1 = arith.constant 0 : index
    %0 = vector.load %arg3[%c0, %c0_0, %c0_1] : memref<1x8x128xbf16, #tpu.memory_space<vmem>>, vector<1x8x128xbf16>
    %1 = vector.shape_cast %0 : vector<1x8x128xbf16> to vector<8x128xbf16>
    %2 = arith.extf %1 : vector<8x128xbf16> to vector<8x128xf32>
    %c0_2 = arith.constant 0 : index
    %c0_3 = arith.constant 0 : index
    %3 = vector.load %arg1[%c0_2, %c0_3] : memref<1x128xf32, #tpu.memory_space<vmem>>, vector<1x128xf32>
    %4 = vector.broadcast %3 : vector<1x128xf32> to vector<8x128xf32>
    %5 = arith.mulf %2, %4 : vector<8x128xf32>
    %c0_4 = arith.constant 0 : index
    %c0_5 = arith.constant 0 : index
    %6 = vector.load %arg2[%c0_4, %c0_5] : memref<1x128xf32, #tpu.memory_space<vmem>>, vector<1x128xf32>
    %7 = vector.broadcast %6 : vector<1x128xf32> to vector<8x128xf32>
    %8 = arith.addf %5, %7 : vector<8x128xf32>
    %cst = arith.constant 0.000000e+00 : f32
    %9 = vector.broadcast %cst : f32 to vector<8x128xf32>
    %10 = arith.maximumf %8, %9 : vector<8x128xf32>
    %11 = tpu.iota {dimensions = array<i32: 0>} : vector<8x128xi32>
    %c8_i32 = arith.constant 8 : i32
    %c0_i32 = arith.constant 0 : i32
    %12 = arith.cmpi eq, %c8_i32, %c0_i32 : i32
    %c1_i32 = arith.constant 1 : i32
    %13 = arith.select %12, %c1_i32, %c8_i32 : i32
    %14 = vector.broadcast %13 : i32 to vector<8x128xi32>
    %15 = arith.remsi %11, %14 : vector<8x128xi32>
    %c0_i32_6 = arith.constant 0 : i32
    %16 = vector.broadcast %c0_i32_6 : i32 to vector<8x128xi32>
    %17 = arith.cmpi ne, %15, %16 : vector<8x128xi32>
    %c0_i32_7 = arith.constant 0 : i32
    %18 = vector.broadcast %c0_i32_7 : i32 to vector<8x128xi32>
    %19 = arith.cmpi slt, %15, %18 : vector<8x128xi32>
    %c0_i32_8 = arith.constant 0 : i32
    %20 = arith.cmpi slt, %13, %c0_i32_8 : i32
    %21 = vector.broadcast %20 : i1 to vector<8x128xi1>
    %22 = vector.broadcast %21 : vector<8x128xi1> to vector<8x128xi1>
    %23 = arith.xori %19, %22 : vector<8x128xi1>
    %24 = arith.andi %23, %17 : vector<8x128xi1>
    %25 = vector.broadcast %13 : i32 to vector<8x128xi32>
    %26 = arith.addi %15, %25 : vector<8x128xi32>
    %27 = arith.select %24, %26, %15 : vector<8x128xi1>, vector<8x128xi32>
    %c0_i32_9 = arith.constant 0 : i32
    %28 = vector.broadcast %c0_i32_9 : i32 to vector<8x128xi32>
    %29 = arith.cmpi sgt, %27, %28 : vector<8x128xi32>
    %c1_i32_10 = arith.constant 1 : i32
    %30 = tpu.dynamic_rotate %10 by %c1_i32_10 dim 0 : vector<8x128xf32>, i32 -> vector<8x128xf32>
    %cst_11 = arith.constant 0.000000e+00 : f32
    %31 = vector.broadcast %cst_11 : f32 to vector<8x128xf32>
    %32 = arith.select %29, %30, %31 : vector<8x128xi1>, vector<8x128xf32>
    %c7_i32 = arith.constant 7 : i32
    %33 = vector.broadcast %c7_i32 : i32 to vector<8x128xi32>
    %34 = arith.cmpi slt, %27, %33 : vector<8x128xi32>
    %c7_i32_12 = arith.constant 7 : i32
    %35 = tpu.dynamic_rotate %10 by %c7_i32_12 dim 0 : vector<8x128xf32>, i32 -> vector<8x128xf32>
    %cst_13 = arith.constant 0.000000e+00 : f32
    %36 = vector.broadcast %cst_13 : f32 to vector<8x128xf32>
    %37 = arith.select %34, %35, %36 : vector<8x128xi1>, vector<8x128xf32>
    %38 = tpu.concatenate %32, %10, %37 in 1 : vector<8x128xf32>, vector<8x128xf32>, vector<8x128xf32> -> vector<8x384xf32>
    %39 = arith.truncf %38 : vector<8x384xf32> to vector<8x384xbf16>
    %c0_14 = arith.constant 0 : index
    %c0_15 = arith.constant 0 : index
    %40 = vector.load %arg4[%c0_14, %c0_15] : memref<384x128xbf16, #tpu.memory_space<vmem>>, vector<384x128xbf16>
    %cst_16 = arith.constant dense<0.000000e+00> : vector<8x128xf32>
    %41 = tpu.matmul %39, %40, %cst_16 {dimension_numbers = #tpu.dot_dimension_numbers<[1], [0], [0], [1], [0, 0, 1, 1], [], []>} : vector<8x384xbf16>, vector<384x128xbf16>, vector<8x128xf32> -> vector<8x128xf32>
    %cst_17 = arith.constant dense<0.000000e+00> : vector<128xf32>
    %42 = vector.multi_reduction <add>, %41, %cst_17 [0] : vector<8x128xf32> to vector<128xf32>
    %43 = vector.shape_cast %42 : vector<128xf32> to vector<1x128xf32>
    %44 = arith.mulf %41, %41 : vector<8x128xf32>
    %cst_18 = arith.constant dense<0.000000e+00> : vector<128xf32>
    %45 = vector.multi_reduction <add>, %44, %cst_18 [0] : vector<8x128xf32> to vector<128xf32>
    %46 = vector.shape_cast %45 : vector<128xf32> to vector<1x128xf32>
    %47 = tpu.concatenate %43, %46 in 0 : vector<1x128xf32>, vector<1x128xf32> -> vector<2x128xf32>
    %48 = vector.shape_cast %47 : vector<2x128xf32> to vector<1x2x128xf32>
    %c0_19 = arith.constant 0 : index
    %c0_20 = arith.constant 0 : index
    %c0_21 = arith.constant 0 : index
    %49 = vector.load %arg6[%c0_19, %c0_20, %c0_21] : memref<1x2x128xf32, #tpu.memory_space<vmem>>, vector<1x2x128xf32>
    tpu.vector_store %arg6[%c0_19, %c0_20, %c0_21], %48 {strides = array<i32>} : memref<1x2x128xf32, #tpu.memory_space<vmem>>, vector<1x2x128xf32>,
    %50 = arith.truncf %41 : vector<8x128xf32> to vector<8x128xbf16>
    %51 = vector.shape_cast %50 : vector<8x128xbf16> to vector<1x8x128xbf16>
    %c0_22 = arith.constant 0 : index
    %c0_23 = arith.constant 0 : index
    %c0_24 = arith.constant 0 : index
    %52 = vector.load %arg5[%c0_22, %c0_23, %c0_24] : memref<1x8x128xbf16, #tpu.memory_space<vmem>>, vector<1x8x128xbf16>
    tpu.vector_store %arg5[%c0_22, %c0_23, %c0_24], %51 {strides = array<i32>} : memref<1x8x128xbf16, #tpu.memory_space<vmem>>, vector<1x8x128xbf16>,
    return
  }
  func.func @transform_0(%arg0: i32) -> (i32, i32) {
    %c0_i32 = arith.constant 0 : i32
    %c0_i32_0 = arith.constant 0 : i32
    %c0_i32_1 = arith.constant 0 : i32
    return %c0_i32, %c0_i32_0 : i32, i32
  }
  func.func @transform_1(%arg0: i32) -> (i32, i32) {
    %c0_i32 = arith.constant 0 : i32
    %c0_i32_0 = arith.constant 0 : i32
    %c0_i32_1 = arith.constant 0 : i32
    return %c0_i32, %c0_i32_0 : i32, i32
  }
  func.func @transform_2(%arg0: i32) -> (i32, i32, i32) {
    %c0_i32 = arith.constant 0 : i32
    %c0_i32_0 = arith.constant 0 : i32
    %c0_i32_1 = arith.constant 0 : i32
    return %arg0, %c0_i32, %c0_i32_0 : i32, i32, i32
  }
  func.func @transform_3(%arg0: i32) -> (i32, i32) {
    %c0_i32 = arith.constant 0 : i32
    %c0_i32_0 = arith.constant 0 : i32
    %c0_i32_1 = arith.constant 0 : i32
    return %c0_i32, %c0_i32_0 : i32, i32
  }
  func.func @transform_4(%arg0: i32) -> (i32, i32, i32) {
    %c0_i32 = arith.constant 0 : i32
    %c0_i32_0 = arith.constant 0 : i32
    %c0_i32_1 = arith.constant 0 : i32
    return %arg0, %c0_i32, %c0_i32_0 : i32, i32, i32
  }
  func.func @transform_5(%arg0: i32) -> (i32, i32, i32) {
    %c0_i32 = arith.constant 0 : i32
    %c0_i32_0 = arith.constant 0 : i32
    %c0_i32_1 = arith.constant 0 : i32
    return %arg0, %c0_i32, %c0_i32_0 : i32, i32, i32
  }
}

module attributes {stable_mosaic.version = 11 : i64} {
  func.func @_bn_residual_kernel(%arg0: i32, %arg1: memref<1x128xf32, #tpu.memory_space<vmem>>, %arg2: memref<1x128xf32, #tpu.memory_space<vmem>>, %arg3: memref<1x8x128xbf16, #tpu.memory_space<vmem>>, %arg4: memref<1x8x128xf32, #tpu.memory_space<vmem>>, %arg5: memref<1x8x128xf32, #tpu.memory_space<vmem>>) attributes {dimension_semantics = [#tpu.dimension_semantics<parallel>], iteration_bounds = array<i64: 2>, scalar_prefetch = 0 : i64, scratch_operands = 0 : i64, tpu.core_type = #tpu.core_type<tc>, window_params = [{pipeline_mode = #tpu.pipeline_mode<synchronous>, transform_indices = @transform_0, window_bounds = array<i64: 1, 128>}, {pipeline_mode = #tpu.pipeline_mode<synchronous>, transform_indices = @transform_1, window_bounds = array<i64: 1, 128>}, {transform_indices = @transform_2, window_bounds = array<i64: 1, 8, 128>}, {transform_indices = @transform_3, window_bounds = array<i64: 1, 8, 128>}, {transform_indices = @transform_4, window_bounds = array<i64: 1, 8, 128>}]} {
    %c0 = arith.constant 0 : index
    %c0_0 = arith.constant 0 : index
    %0 = vector.load %arg1[%c0, %c0_0] : memref<1x128xf32, #tpu.memory_space<vmem>>, vector<1x128xf32>
    %1 = vector.shape_cast %0 : vector<1x128xf32> to vector<1x1x128xf32>
    %c0_1 = arith.constant 0 : index
    %c0_2 = arith.constant 0 : index
    %2 = vector.load %arg2[%c0_1, %c0_2] : memref<1x128xf32, #tpu.memory_space<vmem>>, vector<1x128xf32>
    %3 = vector.shape_cast %2 : vector<1x128xf32> to vector<1x1x128xf32>
    %c0_3 = arith.constant 0 : index
    %c0_4 = arith.constant 0 : index
    %c0_5 = arith.constant 0 : index
    %4 = vector.load %arg3[%c0_3, %c0_4, %c0_5] : memref<1x8x128xbf16, #tpu.memory_space<vmem>>, vector<1x8x128xbf16>
    %5 = arith.extf %4 : vector<1x8x128xbf16> to vector<1x8x128xf32>
    %6 = vector.broadcast %1 : vector<1x1x128xf32> to vector<1x8x128xf32>
    %7 = arith.mulf %5, %6 : vector<1x8x128xf32>
    %8 = vector.broadcast %3 : vector<1x1x128xf32> to vector<1x8x128xf32>
    %9 = arith.addf %7, %8 : vector<1x8x128xf32>
    %c0_6 = arith.constant 0 : index
    %c0_7 = arith.constant 0 : index
    %c0_8 = arith.constant 0 : index
    %10 = vector.load %arg4[%c0_6, %c0_7, %c0_8] : memref<1x8x128xf32, #tpu.memory_space<vmem>>, vector<1x8x128xf32>
    %11 = arith.addf %9, %10 : vector<1x8x128xf32>
    %cst = arith.constant 0.000000e+00 : f32
    %12 = vector.broadcast %cst : f32 to vector<1x8x128xf32>
    %13 = arith.maximumf %11, %12 : vector<1x8x128xf32>
    %c0_9 = arith.constant 0 : index
    %c0_10 = arith.constant 0 : index
    %c0_11 = arith.constant 0 : index
    %14 = vector.load %arg5[%c0_9, %c0_10, %c0_11] : memref<1x8x128xf32, #tpu.memory_space<vmem>>, vector<1x8x128xf32>
    tpu.vector_store %arg5[%c0_9, %c0_10, %c0_11], %13 {strides = array<i32>} : memref<1x8x128xf32, #tpu.memory_space<vmem>>, vector<1x8x128xf32>,
    return
  }
  func.func @transform_0(%arg0: i32) -> (i32, i32) {
    %c0_i32 = arith.constant 0 : i32
    %c0_i32_0 = arith.constant 0 : i32
    %c0_i32_1 = arith.constant 0 : i32
    return %c0_i32, %c0_i32_0 : i32, i32
  }
  func.func @transform_1(%arg0: i32) -> (i32, i32) {
    %c0_i32 = arith.constant 0 : i32
    %c0_i32_0 = arith.constant 0 : i32
    %c0_i32_1 = arith.constant 0 : i32
    return %c0_i32, %c0_i32_0 : i32, i32
  }
  func.func @transform_2(%arg0: i32) -> (i32, i32, i32) {
    %c0_i32 = arith.constant 0 : i32
    %c0_i32_0 = arith.constant 0 : i32
    %c0_i32_1 = arith.constant 0 : i32
    return %arg0, %c0_i32, %c0_i32_0 : i32, i32, i32
  }
  func.func @transform_3(%arg0: i32) -> (i32, i32, i32) {
    %c0_i32 = arith.constant 0 : i32
    %c0_i32_0 = arith.constant 0 : i32
    %c0_i32_1 = arith.constant 0 : i32
    return %arg0, %c0_i32, %c0_i32_0 : i32, i32, i32
  }
  func.func @transform_4(%arg0: i32) -> (i32, i32, i32) {
    %c0_i32 = arith.constant 0 : i32
    %c0_i32_0 = arith.constant 0 : i32
    %c0_i32_1 = arith.constant 0 : i32
    return %arg0, %c0_i32, %c0_i32_0 : i32, i32, i32
  }
}

</mosaic_0001>

<llo_original>
// kernel: squeeze.4
$region0: #{squeeze.4}
  %s0 = inlined_call_operand.vmem [shape: f32[2,128], index: 0, kind: input, shape index: {}]
  %s1 = inlined_call_operand.vmem [shape: f32[64,4], index: 1, kind: output, shape index: {}]
  $region1: #{squeeze.4} parent=0
    #allocation0 [shape = 'u8[4096]{0}', space=vmem, size = 0x1000, scoped, tag = 'scoped mem for input reshape']
    %s3 = ssub.s32 4, 1
    %v4 = vld [vmem:[%s0] sm:%s3]
    %5 = vst [vmem:[#allocation0] sm:%s3] %v4
    %v6 = vld [vmem:[#allocation0] sm:$0x3]
    %vm7 = vcmask 31744
    %8 = vst.msk [vmem:[%s1] sm:$0x1] %vm7, %v6
    %s9 = scalar_lea.vmem %s1, 31
    %10 = vst.msk [vmem:[%s9] sm:$0x2] %vm7, %v6
    %v11 = vld [vmem:[#allocation0] sm:$0x3]
    %12 = vrot.lane.b32.xlu0 %v11, 124
    %v13 = vpop.permute.xlu0 %12
    %vm14 = vcmask 31744
    %s15 = scalar_lea.vmem %s1, 1
    %16 = vst.msk [vmem:[%s15] sm:$0x1] %vm14, %v13
    %s17 = scalar_lea.vmem %s1, 32
    %18 = vst.msk [vmem:[%s17] sm:$0x2] %vm14, %v13
    %v19 = vld [vmem:[#allocation0] sm:$0x3]
    %20 = vrot.lane.b32.xlu0 %v19, 120
    %v21 = vpop.permute.xlu0 %20
    %vm22 = vcmask 31744
    %s23 = scalar_lea.vmem %s1, 2
    %24 = vst.msk [vmem:[%s23] sm:$0x1] %vm22, %v21
    %s25 = scalar_lea.vmem %s1, 33
    %26 = vst.msk [vmem:[%s25] sm:$0x2] %vm22, %v21
    %v27 = vld [vmem:[#allocation0] sm:$0x3]
    %28 = vrot.lane.b32.xlu0 %v27, 116
    %v29 = vpop.permute.xlu0 %28
    %vm30 = vcmask 31744
    %s31 = scalar_lea.vmem %s1, 3
    %32 = vst.msk [vmem:[%s31] sm:$0x1] %vm30, %v29
    %s33 = scalar_lea.vmem %s1, 34
    %34 = vst.msk [vmem:[%s33] sm:$0x2] %vm30, %v29
    %v35 = vld [vmem:[#allocation0] sm:$0x3]
    %36 = vrot.lane.b32.xlu0 %v35, 112
    %v37 = vpop.permute.xlu0 %36
    %vm38 = vcmask 31744
    %s39 = scalar_lea.vmem %s1, 4
    %40 = vst.msk [vmem:[%s39] sm:$0x1] %vm38, %v37
    %s41 = scalar_lea.vmem %s1, 35
    %42 = vst.msk [vmem:[%s41] sm:$0x2] %vm38, %v37
    %v43 = vld [vmem:[#allocation0] sm:$0x3]
    %44 = vrot.lane.b32.xlu0 %v43, 108
    %v45 = vpop.permute.xlu0 %44
    %vm46 = vcmask 31744
    %s47 = scalar_lea.vmem %s1, 5
    %48 = vst.msk [vmem:[%s47] sm:$0x1] %vm46, %v45
    %s49 = scalar_lea.vmem %s1, 36
    %50 = vst.msk [vmem:[%s49] sm:$0x2] %vm46, %v45
    %v51 = vld [vmem:[#allocation0] sm:$0x3]
    %52 = vrot.lane.b32.xlu0 %v51, 104
    %v53 = vpop.permute.xlu0 %52
    %vm54 = vcmask 31744
    %s55 = scalar_lea.vmem %s1, 6
    %56 = vst.msk [vmem:[%s55] sm:$0x1] %vm54, %v53
    %s57 = scalar_lea.vmem %s1, 37
    %58 = vst.msk [vmem:[%s57] sm:$0x2] %vm54, %v53
    %v59 = vld [vmem:[#allocation0] sm:$0x3]
    %60 = vrot.lane.b32.xlu0 %v59, 100
    %v61 = vpop.permute.xlu0 %60
    %vm62 = vcmask 31744
    %s63 = scalar_lea.vmem %s1, 7
    %64 = vst.msk [vmem:[%s63] sm:$0x1] %vm62, %v61
    %s65 = scalar_lea.vmem %s1, 38
    %66 = vst.msk [vmem:[%s65] sm:$0x2] %vm62, %v61
    %v67 = vld [vmem:[#allocation0] sm:$0x3]
    %68 = vrot.lane.b32.xlu0 %v67, 96
    %v69 = vpop.permute.xlu0 %68
    %vm70 = vcmask 31744
    %s71 = scalar_lea.vmem %s1, 8
    %72 = vst.msk [vmem:[%s71] sm:$0x1] %vm70, %v69
    %s73 = scalar_lea.vmem %s1, 39
    %74 = vst.msk [vmem:[%s73] sm:$0x2] %vm70, %v69
    %v75 = vld [vmem:[#allocation0] sm:$0x3]
    %76 = vrot.lane.b32.xlu0 %v75, 92
    %v77 = vpop.permute.xlu0 %76
    %vm78 = vcmask 31744
    %s79 = scalar_lea.vmem %s1, 9
    %80 = vst.msk [vmem:[%s79] sm:$0x1] %vm78, %v77
    %s81 = scalar_lea.vmem %s1, 40
    %82 = vst.msk [vmem:[%s81] sm:$0x2] %vm78, %v77
    %v83 = vld [vmem:[#allocation0] sm:$0x3]
    %84 = vrot.lane.b32.xlu0 %v83, 88
    %v85 = vpop.permute.xlu0 %84
    %vm86 = vcmask 31744
    %s87 = scalar_lea.vmem %s1, 10
    %88 = vst.msk [vmem:[%s87] sm:$0x1] %vm86, %v85
    %s89 = scalar_lea.vmem %s1, 41
    %90 = vst.msk [vmem:[%s89] sm:$0x2] %vm86, %v85
    %v91 = vld [vmem:[#allocation0] sm:$0x3]
    %92 = vrot.lane.b32.xlu0 %v91, 84
    %v93 = vpop.permute.xlu0 %92
    %vm94 = vcmask 31744
    %s95 = scalar_lea.vmem %s1, 11
    %96 = vst.msk [vmem:[%s95] sm:$0x1] %vm94, %v93
    %s97 = scalar_lea.vmem %s1, 42
    %98 = vst.msk [vmem:[%s97] sm:$0x2] %vm94, %v93
    %v99 = vld [vmem:[#allocation0] sm:$0x3]
    %100 = vrot.lane.b32.xlu0 %v99, 80
    %v101 = vpop.permute.xlu0 %100
    %vm102 = vcmask 31744
    %s103 = scalar_lea.vmem %s1, 12
    %104 = vst.msk [vmem:[%s103] sm:$0x1] %vm102, %v101
    %s105 = scalar_lea.vmem %s1, 43
    %106 = vst.msk [vmem:[%s105] sm:$0x2] %vm102, %v101
    %v107 = vld [vmem:[#allocation0] sm:$0x3]
    %108 = vrot.lane.b32.xlu0 %v107, 76
    %v109 = vpop.permute.xlu0 %108
    %vm110 = vcmask 31744
    %s111 = scalar_lea.vmem %s1, 13
    %112 = vst.msk [vmem:[%s111] sm:$0x1] %vm110, %v109
    %s113 = scalar_lea.vmem %s1, 44
    %114 = vst.msk [vmem:[%s113] sm:$0x2] %vm110, %v109
    %v115 = vld [vmem:[#allocation0] sm:$0x3]
    %116 = vrot.lane.b32.xlu0 %v115, 72
    %v117 = vpop.permute.xlu0 %116
    %vm118 = vcmask 31744
    %s119 = scalar_lea.vmem %s1, 14
    %120 = vst.msk [vmem:[%s119] sm:$0x1] %vm118, %v117
    %s121 = scalar_lea.vmem %s1, 45
    %122 = vst.msk [vmem:[%s121] sm:$0x2] %vm118, %v117
    %v123 = vld [vmem:[#allocation0] sm:$0x3]
    %124 = vrot.lane.b32.xlu0 %v123, 68
    %v125 = vpop.permute.xlu0 %124
    %vm126 = vcmask 31744
    %s127 = scalar_lea.vmem %s1, 15
    %128 = vst.msk [vmem:[%s127] sm:$0x1] %vm126, %v125
    %s129 = scalar_lea.vmem %s1, 46
    %130 = vst.msk [vmem:[%s129] sm:$0x2] %vm126, %v125
    %v131 = vld [vmem:[#allocation0] sm:$0x3]
    %132 = vrot.lane.b32.xlu0 %v131, 64
    %v133 = vpop.permute.xlu0 %132
    %vm134 = vcmask 31744
    %s135 = scalar_lea.vmem %s1, 16
    %136 = vst.msk [vmem:[%s135] sm:$0x1] %vm134, %v133
    %s137 = scalar_lea.vmem %s1, 47
    %138 = vst.msk [vmem:[%s137] sm:$0x2] %vm134, %v133
    %v139 = vld [vmem:[#allocation0] sm:$0x3]
    %140 = vrot.lane.b32.xlu0 %v139, 60
    %v141 = vpop.permute.xlu0 %140
    %vm142 = vcmask 31744
    %s143 = scalar_lea.vmem %s1, 17
    %144 = vst.msk [vmem:[%s143] sm:$0x1] %vm142, %v141
    %s145 = scalar_lea.vmem %s1, 48
    %146 = vst.msk [vmem:[%s145] sm:$0x2] %vm142, %v141
    %v147 = vld [vmem:[#allocation0] sm:$0x3]
    %148 = vrot.lane.b32.xlu0 %v147, 56
    %v149 = vpop.permute.xlu0 %148
    %vm150 = vcmask 31744
    %s151 = scalar_lea.vmem %s1, 18
    %152 = vst.msk [vmem:[%s151] sm:$0x1] %vm150, %v149
    %s153 = scalar_lea.vmem %s1, 49
    %154 = vst.msk [vmem:[%s153] sm:$0x2] %vm150, %v149
    %v155 = vld [vmem:[#allocation0] sm:$0x3]
    %156 = vrot.lane.b32.xlu0 %v155, 52
    %v157 = vpop.permute.xlu0 %156
    %vm158 = vcmask 31744
    %s159 = scalar_lea.vmem %s1, 19
    %160 = vst.msk [vmem:[%s159] sm:$0x1] %vm158, %v157
    %s161 = scalar_lea.vmem %s1, 50
    %162 = vst.msk [vmem:[%s161] sm:$0x2] %vm158, %v157
    %v163 = vld [vmem:[#allocation0] sm:$0x3]
    %164 = vrot.lane.b32.xlu0 %v163, 48
    %v165 = vpop.permute.xlu0 %164
    %vm166 = vcmask 31744
    %s167 = scalar_lea.vmem %s1, 20
    %168 = vst.msk [vmem:[%s167] sm:$0x1] %vm166, %v165
    %s169 = scalar_lea.vmem %s1, 51
    %170 = vst.msk [vmem:[%s169] sm:$0x2] %vm166, %v165
    %v171 = vld [vmem:[#allocation0] sm:$0x3]
    %172 = vrot.lane.b32.xlu0 %v171, 44
    %v173 = vpop.permute.xlu0 %172
    %vm174 = vcmask 31744
    %s175 = scalar_lea.vmem %s1, 21
    %176 = vst.msk [vmem:[%s175] sm:$0x1] %vm174, %v173
    %s177 = scalar_lea.vmem %s1, 52
    %178 = vst.msk [vmem:[%s177] sm:$0x2] %vm174, %v173
    %v179 = vld [vmem:[#allocation0] sm:$0x3]
    %180 = vrot.lane.b32.xlu0 %v179, 40
    %v181 = vpop.permute.xlu0 %180
    %vm182 = vcmask 31744
    %s183 = scalar_lea.vmem %s1, 22
    %184 = vst.msk [vmem:[%s183] sm:$0x1] %vm182, %v181
    %s185 = scalar_lea.vmem %s1, 53
    %186 = vst.msk [vmem:[%s185] sm:$0x2] %vm182, %v181
    %v187 = vld [vmem:[#allocation0] sm:$0x3]
    %188 = vrot.lane.b32.xlu0 %v187, 36
    %v189 = vpop.permute.xlu0 %188
    %vm190 = vcmask 31744
    %s191 = scalar_lea.vmem %s1, 23
    %192 = vst.msk [vmem:[%s191] sm:$0x1] %vm190, %v189
    %s193 = scalar_lea.vmem %s1, 54
    %194 = vst.msk [vmem:[%s193] sm:$0x2] %vm190, %v189
    %v195 = vld [vmem:[#allocation0] sm:$0x3]
    %196 = vrot.lane.b32.xlu0 %v195, 32
    %v197 = vpop.permute.xlu0 %196
    %vm198 = vcmask 31744
    %s199 = scalar_lea.vmem %s1, 24
    %200 = vst.msk [vmem:[%s199] sm:$0x1] %vm198, %v197
    %s201 = scalar_lea.vmem %s1, 55
    %202 = vst.msk [vmem:[%s201] sm:$0x2] %vm198, %v197
    %v203 = vld [vmem:[#allocation0] sm:$0x3]
    %204 = vrot.lane.b32.xlu0 %v203, 28
    %v205 = vpop.permute.xlu0 %204
    %vm206 = vcmask 31744
    %s207 = scalar_lea.vmem %s1, 25
    %208 = vst.msk [vmem:[%s207] sm:$0x1] %vm206, %v205
    %s209 = scalar_lea.vmem %s1, 56
    %210 = vst.msk [vmem:[%s209] sm:$0x2] %vm206, %v205
    %v211 = vld [vmem:[#allocation0] sm:$0x3]
    %212 = vrot.lane.b32.xlu0 %v211, 24
    %v213 = vpop.permute.xlu0 %212
    %vm214 = vcmask 31744
    %s215 = scalar_lea.vmem %s1, 26
    %216 = vst.msk [vmem:[%s215] sm:$0x1] %vm214, %v213
    %s217 = scalar_lea.vmem %s1, 57
    %218 = vst.msk [vmem:[%s217] sm:$0x2] %vm214, %v213
    %v219 = vld [vmem:[#allocation0] sm:$0x3]
    %220 = vrot.lane.b32.xlu0 %v219, 20
    %v221 = vpop.permute.xlu0 %220
    %vm222 = vcmask 31744
    %s223 = scalar_lea.vmem %s1, 27
    %224 = vst.msk [vmem:[%s223] sm:$0x1] %vm222, %v221
    %s225 = scalar_lea.vmem %s1, 58
    %226 = vst.msk [vmem:[%s225] sm:$0x2] %vm222, %v221
    %v227 = vld [vmem:[#allocation0] sm:$0x3]
    %228 = vrot.lane.b32.xlu0 %v227, 16
    %v229 = vpop.permute.xlu0 %228
    %vm230 = vcmask 31744
    %s231 = scalar_lea.vmem %s1, 28
    %232 = vst.msk [vmem:[%s231] sm:$0x1] %vm230, %v229
    %s233 = scalar_lea.vmem %s1, 59
    %234 = vst.msk [vmem:[%s233] sm:$0x2] %vm230, %v229
    %v235 = vld [vmem:[#allocation0] sm:$0x3]
    %236 = vrot.lane.b32.xlu0 %v235, 12
    %v237 = vpop.permute.xlu0 %236
    %vm238 = vcmask 31744
    %s239 = scalar_lea.vmem %s1, 29
    %240 = vst.msk [vmem:[%s239] sm:$0x1] %vm238, %v237
    %s241 = scalar_lea.vmem %s1, 60
    %242 = vst.msk [vmem:[%s241] sm:$0x2] %vm238, %v237
    %v243 = vld [vmem:[#allocation0] sm:$0x3]
    %244 = vrot.lane.b32.xlu0 %v243, 8
    %v245 = vpop.permute.xlu0 %244
    %vm246 = vcmask 31744
    %s247 = scalar_lea.vmem %s1, 30
    %248 = vst.msk [vmem:[%s247] sm:$0x1] %vm246, %v245
    %s249 = scalar_lea.vmem %s1, 61
    %250 = vst.msk [vmem:[%s249] sm:$0x2] %vm246, %v245
    %v251 = vld [vmem:[#allocation0] sm:$0x3]
    %252 = vrot.lane.b32.xlu0 %v251, 4
    %v253 = vpop.permute.xlu0 %252
    %vm254 = vcmask 31744
    %s255 = scalar_lea.vmem %s1, 31
    %256 = vst.msk [vmem:[%s255] sm:$0x1] %vm254, %v253
    %s257 = scalar_lea.vmem %s1, 62
    %258 = vst.msk [vmem:[%s257] sm:$0x2] %vm254, %v253

// kernel: tile.28
$region0: #{tile.28}
  #allocation0 [shape = 's32[1]{0}', space=sflag, size = 0x4, scoped, tag = 'scoped memory for tile.28']
  %s0 = inlined_call_operand.vmem [shape: f32[4], index: 0, kind: input, shape index: {}]
  %s1 = inlined_call_operand.vmem [shape: f32[32,4], index: 1, kind: output, shape index: {}]
  // Predicated region
  $region2: #{tile.28} parent=0 // pred_check
    _
  $region3: #{tile.28} parent=0 // pred_check_branch
    %3 = sbr.rel (0) target = $region5
  $region4: #{tile.28} parent=0 // pred_region
    _
  $region5: #{tile.28} parent=0 // pred_fallthru
    _
  %v4 = vld [vmem:[%s0] ss:$0 sm:$0xff]
  %5 = vst [vmem:[%s1] sm:$0xff] %v4
  %s6 = scalar_lea.vmem %s1, 8
  %7 = vst [vmem:[%s6] sm:$0xff] %v4
  %s8 = scalar_lea.vmem %s1, 16
  %9 = vst [vmem:[%s8] sm:$0xff] %v4
  %s10 = scalar_lea.vmem %s1, 24
  %11 = vst [vmem:[%s10] sm:$0xff] %v4

// kernel: tile.29
$region0: #{tile.29}
  %s0 = inlined_call_operand.vmem [shape: f32[32,4], index: 0, kind: input, shape index: {}]
  %s1 = inlined_call_operand.vmem [shape: f32[1,128], index: 1, kind: output, shape index: {}]
  $region1: #{tile.29} parent=0
    #allocation0 [shape = 'u8[4096]{0}', space=vmem, size = 0x1000, scoped, tag = 'scoped mem for output reshape']
    %v2 = vld [vmem:[%s0] sm:$0x1]
    %vm3 = vcmask 31744
    %4 = vst.msk [vmem:[#allocation0] sm:$0x1] %vm3, %v2
    %s5 = scalar_lea.vmem %s0, 31
    %v6 = vld [vmem:[%s5] sm:$0x1]
    %7 = vrot.lane.b32.xlu0 %v6, 124
    %v8 = vpop.permute.xlu0 %7
    %vm9 = vcmask 1048544
    %10 = vst.msk [vmem:[#allocation0] sm:$0x1] %vm9, %v8
    %s11 = scalar_lea.vmem %s0, 30
    %v12 = vld [vmem:[%s11] sm:$0x1]
    %13 = vrot.lane.b32.xlu0 %v12, 120
    %v14 = vpop.permute.xlu0 %13
    %vm15 = vcmask 1015744
    %16 = vst.msk [vmem:[#allocation0] sm:$0x1] %vm15, %v14
    %s17 = scalar_lea.vmem %s0, 29
    %v18 = vld [vmem:[%s17] sm:$0x1]
    %19 = vrot.lane.b32.xlu0 %v18, 116
    %v20 = vpop.permute.xlu0 %19
    %vm21 = vcmask 982944
    %22 = vst.msk [vmem:[#allocation0] sm:$0x1] %vm21, %v20
    %s23 = scalar_lea.vmem %s0, 28
    %v24 = vld [vmem:[%s23] sm:$0x1]
    %25 = vrot.lane.b32.xlu0 %v24, 112
    %v26 = vpop.permute.xlu0 %25
    %vm27 = vcmask 950144
    %28 = vst.msk [vmem:[#allocation0] sm:$0x1] %vm27, %v26
    %s29 = scalar_lea.vmem %s0, 27
    %v30 = vld [vmem:[%s29] sm:$0x1]
    %31 = vrot.lane.b32.xlu0 %v30, 108
    %v32 = vpop.permute.xlu0 %31
    %vm33 = vcmask 917344
    %34 = vst.msk [vmem:[#allocation0] sm:$0x1] %vm33, %v32
    %s35 = scalar_lea.vmem %s0, 26
    %v36 = vld [vmem:[%s35] sm:$0x1]
    %37 = vrot.lane.b32.xlu0 %v36, 104
    %v38 = vpop.permute.xlu0 %37
    %vm39 = vcmask 884544
    %40 = vst.msk [vmem:[#allocation0] sm:$0x1] %vm39, %v38
    %s41 = scalar_lea.vmem %s0, 25
    %v42 = vld [vmem:[%s41] sm:$0x1]
    %43 = vrot.lane.b32.xlu0 %v42, 100
    %v44 = vpop.permute.xlu0 %43
    %vm45 = vcmask 851744
    %46 = vst.msk [vmem:[#allocation0] sm:$0x1] %vm45, %v44
    %s47 = scalar_lea.vmem %s0, 24
    %v48 = vld [vmem:[%s47] sm:$0x1]
    %49 = vrot.lane.b32.xlu0 %v48, 96
    %v50 = vpop.permute.xlu0 %49
    %vm51 = vcmask 818944
    %52 = vst.msk [vmem:[#allocation0] sm:$0x1] %vm51, %v50
    %s53 = scalar_lea.vmem %s0, 23
    %v54 = vld [vmem:[%s53] sm:$0x1]
    %55 = vrot.lane.b32.xlu0 %v54, 92
    %v56 = vpop.permute.xlu0 %55
    %vm57 = vcmask 786144
    %58 = vst.msk [vmem:[#allocation0] sm:$0x1] %vm57, %v56
    %s59 = scalar_lea.vmem %s0, 22
    %v60 = vld [vmem:[%s59] sm:$0x1]
    %61 = vrot.lane.b32.xlu0 %v60, 88
    %v62 = vpop.permute.xlu0 %61
    %vm63 = vcmask 753344
    %64 = vst.msk [vmem:[#allocation0] sm:$0x1] %vm63, %v62
    %s65 = scalar_lea.vmem %s0, 21
    %v66 = vld [vmem:[%s65] sm:$0x1]
    %67 = vrot.lane.b32.xlu0 %v66, 84
    %v68 = vpop.permute.xlu0 %67
    %vm69 = vcmask 720544
    %70 = vst.msk [vmem:[#allocation0] sm:$0x1] %vm69, %v68
    %s71 = scalar_lea.vmem %s0, 20
    %v72 = vld [vmem:[%s71] sm:$0x1]
    %73 = vrot.lane.b32.xlu0 %v72, 80
    %v74 = vpop.permute.xlu0 %73
    %vm75 = vcmask 687744
    %76 = vst.msk [vmem:[#allocation0] sm:$0x1] %vm75, %v74
    %s77 = scalar_lea.vmem %s0, 19
    %v78 = vld [vmem:[%s77] sm:$0x1]
    %79 = vrot.lane.b32.xlu0 %v78, 76
    %v80 = vpop.permute.xlu0 %79
    %vm81 = vcmask 654944
    %82 = vst.msk [vmem:[#allocation0] sm:$0x1] %vm81, %v80
    %s83 = scalar_lea.vmem %s0, 18
    %v84 = vld [vmem:[%s83] sm:$0x1]
    %85 = vrot.lane.b32.xlu0 %v84, 72
    %v86 = vpop.permute.xlu0 %85
    %vm87 = vcmask 622144
    %88 = vst.msk [vmem:[#allocation0] sm:$0x1] %vm87, %v86
    %s89 = scalar_lea.vmem %s0, 17
    %v90 = vld [vmem:[%s89] sm:$0x1]
    %91 = vrot.lane.b32.xlu0 %v90, 68
    %v92 = vpop.permute.xlu0 %91
    %vm93 = vcmask 589344
    %94 = vst.msk [vmem:[#allocation0] sm:$0x1] %vm93, %v92
    %s95 = scalar_lea.vmem %s0, 16
    %v96 = vld [vmem:[%s95] sm:$0x1]
    %97 = vrot.lane.b32.xlu0 %v96, 64
    %v98 = vpop.permute.xlu0 %97
    %vm99 = vcmask 556544
    %100 = vst.msk [vmem:[#allocation0] sm:$0x1] %vm99, %v98
    %s101 = scalar_lea.vmem %s0, 15
    %v102 = vld [vmem:[%s101] sm:$0x1]
    %103 = vrot.lane.b32.xlu0 %v102, 60
    %v104 = vpop.permute.xlu0 %103
    %vm105 = vcmask 523744
    %106 = vst.msk [vmem:[#allocation0] sm:$0x1] %vm105, %v104
    %s107 = scalar_lea.vmem %s0, 14
    %v108 = vld [vmem:[%s107] sm:$0x1]
    %109 = vrot.lane.b32.xlu0 %v108, 56
    %v110 = vpop.permute.xlu0 %109
    %vm111 = vcmask 490944
    %112 = vst.msk [vmem:[#allocation0] sm:$0x1] %vm111, %v110
    %s113 = scalar_lea.vmem %s0, 13
    %v114 = vld [vmem:[%s113] sm:$0x1]
    %115 = vrot.lane.b32.xlu0 %v114, 52
    %v116 = vpop.permute.xlu0 %115
    %vm117 = vcmask 458144
    %118 = vst.msk [vmem:[#allocation0] sm:$0x1] %vm117, %v116
    %s119 = scalar_lea.vmem %s0, 12
    %v120 = vld [vmem:[%s119] sm:$0x1]
    %121 = vrot.lane.b32.xlu0 %v120, 48
    %v122 = vpop.permute.xlu0 %121
    %vm123 = vcmask 425344
    %124 = vst.msk [vmem:[#allocation0] sm:$0x1] %vm123, %v122
    %s125 = scalar_lea.vmem %s0, 11
    %v126 = vld [vmem:[%s125] sm:$0x1]
    %127 = vrot.lane.b32.xlu0 %v126, 44
    %v128 = vpop.permute.xlu0 %127
    %vm129 = vcmask 392544
    %130 = vst.msk [vmem:[#allocation0] sm:$0x1] %vm129, %v128
    %s131 = scalar_lea.vmem %s0, 10
    %v132 = vld [vmem:[%s131] sm:$0x1]
    %133 = vrot.lane.b32.xlu0 %v132, 40
    %v134 = vpop.permute.xlu0 %133
    %vm135 = vcmask 359744
    %136 = vst.msk [vmem:[#allocation0] sm:$0x1] %vm135, %v134
    %s137 = scalar_lea.vmem %s0, 9
    %v138 = vld [vmem:[%s137] sm:$0x1]
    %139 = vrot.lane.b32.xlu0 %v138, 36
    %v140 = vpop.permute.xlu0 %139
    %vm141 = vcmask 326944
    %142 = vst.msk [vmem:[#allocation0] sm:$0x1] %vm141, %v140
    %s143 = scalar_lea.vmem %s0, 8
    %v144 = vld [vmem:[%s143] sm:$0x1]
    %145 = vrot.lane.b32.xlu0 %v144, 32
    %v146 = vpop.permute.xlu0 %145
    %vm147 = vcmask 294144
    %148 = vst.msk [vmem:[#allocation0] sm:$0x1] %vm147, %v146
    %s149 = scalar_lea.vmem %s0, 7
    %v150 = vld [vmem:[%s149] sm:$0x1]
    %151 = vrot.lane.b32.xlu0 %v150, 28
    %v152 = vpop.permute.xlu0 %151
    %vm153 = vcmask 261344
    %154 = vst.msk [vmem:[#allocation0] sm:$0x1] %vm153, %v152
    %s155 = scalar_lea.vmem %s0, 6
    %v156 = vld [vmem:[%s155] sm:$0x1]
    %157 = vrot.lane.b32.xlu0 %v156, 24
    %v158 = vpop.permute.xlu0 %157
    %vm159 = vcmask 228544
    %160 = vst.msk [vmem:[#allocation0] sm:$0x1] %vm159, %v158
    %s161 = scalar_lea.vmem %s0, 5
    %v162 = vld [vmem:[%s161] sm:$0x1]
    %163 = vrot.lane.b32.xlu0 %v162, 20
    %v164 = vpop.permute.xlu0 %163
    %vm165 = vcmask 195744
    %166 = vst.msk [vmem:[#allocation0] sm:$0x1] %vm165, %v164
    %s167 = scalar_lea.vmem %s0, 4
    %v168 = vld [vmem:[%s167] sm:$0x1]
    %169 = vrot.lane.b32.xlu0 %v168, 16
    %v170 = vpop.permute.xlu0 %169
    %vm171 = vcmask 162944
    %172 = vst.msk [vmem:[#allocation0] sm:$0x1] %vm171, %v170
    %s173 = scalar_lea.vmem %s0, 3
    %v174 = vld [vmem:[%s173] sm:$0x1]
    %175 = vrot.lane.b32.xlu0 %v174, 12
    %v176 = vpop.permute.xlu0 %175
    %vm177 = vcmask 130144
    %178 = vst.msk [vmem:[#allocation0] sm:$0x1] %vm177, %v176
    %s179 = scalar_lea.vmem %s0, 2
    %v180 = vld [vmem:[%s179] sm:$0x1]
    %181 = vrot.lane.b32.xlu0 %v180, 8
    %v182 = vpop.permute.xlu0 %181
    %vm183 = vcmask 97344
    %184 = vst.msk [vmem:[#allocation0] sm:$0x1] %vm183, %v182
    %s185 = scalar_lea.vmem %s0, 1
    %v186 = vld [vmem:[%s185] sm:$0x1]
    %187 = vrot.lane.b32.xlu0 %v186, 4
    %v188 = vpop.permute.xlu0 %187
    %vm189 = vcmask 64544
    %190 = vst.msk [vmem:[#allocation0] sm:$0x1] %vm189, %v188
    %s192 = ssub.s32 2, 1
    %v193 = vld [vmem:[#allocation0] sm:%s192]
    %s195 = ssub.s32 2, 1
    %196 = vst [vmem:[%s1] sm:%s195] %v193

// kernel: _forward_impl.3
$region0: #{_forward_impl.3}
  #allocation0 [shape = 'u32[]', space=smem, size = 0x4, offset = 0x4, fixed_abs, tag = 'smem constant byte address 0x4 - core index']
  #allocation1 [shape = 'u32[72,128]{1,0:T(1,128)}', space=vmem, size = 0x9000, scoped, tag = 'internal scratch']
  %s0 = inlined_call_operand.vmem [shape: f32[2,8,128], index: 0, kind: input, shape index: {}]
  %s1 = inlined_call_operand.vmem [shape: bf16[384,128], index: 1, kind: input, shape index: {}]
  %s2 = inlined_call_operand.vmem [shape: bf16[2,8,128], index: 2, kind: output, shape index: {0}]
  %s3 = inlined_call_operand.vmem [shape: f32[2,2,128], index: 3, kind: output, shape index: {1}]
  %4 = xla_tuple %s2, %s3
  %s5 = sld [smem:[#allocation0]]
  $region49: #{_forward_impl.3} parent=0
    _
  %s7 = ssub.s32 1, %s5
  %s8 = scalar_select 0, %s7, %s5
  loop: start=0, step=1, limit=4
  $region2: #{_forward_impl.3} parent=0 // loop_pre_header
    _
  $region3: #{_forward_impl.3} parent=0 // loop_header
    %s10 = sphi 0, %s14
    %p11 = scmp.ge.s32.totalorder %s10, 4
    %s20 = sphi 0, %s22
    %s23 = sphi 0, %s20
    %s24 = sphi 0, %s23
    %s40 = sphi 0, %s24
    %s44 = sphi 0, %s44
    %s46 = sphi 0, %s44
    %s47 = sphi 0, %s46
    %s61 = sphi 0, %s47
    %s67 = sphi 0, %s69
    %s70 = sphi 0, %s67
    %s71 = sphi 0, %s70
    %s87 = sphi 0, %s71
    %s93 = sphi 0, %s95
    %s96 = sphi 0, %s93
    %s97 = sphi 0, %s96
    %s113 = sphi 0, %s97
  $region4: #{_forward_impl.3} parent=0 // loop_header_branch
    %13 = sbr.rel (%p11) target = $region8
  $region5: #{_forward_impl.3} parent=0 // loop_body
    %s15 = ssub.s32 %s10, 1
    %s16 = ssub.s32 %s10, 2
    %s17 = sadd.s32 %s10, 1
    %s18 = ssub.s32 %s10, %s17
    %p19 = scmp.eq.s32.totalorder %s18, 0
    %s21 = sadd.s32 %s20, 1
    %s22 = scalar_select %p19, %s20, %s21
    %p25 = pneg %p19
    %p26 = scmp.eq.s32.totalorder %s10, 1
    %p27 = por %p25, %p26
    %p28 = scmp.ne.s32.totalorder %s20, %s23
    %p29 = scmp.eq.s32.totalorder %s10, 0
    %p30 = por %p28, %p29
    %p31 = scmp.ne.s32.totalorder %s20, %s23
    %p32 = scmp.eq.s32.totalorder %s15, 1
    %p33 = por %p31, %p32
    %p34 = scmp.ne.s32.totalorder %s23, %s24
    %p35 = scmp.eq.s32.totalorder %s15, 0
    %p36 = por %p34, %p35
    %p37 = scmp.ne.s32.totalorder %s23, %s24
    %p38 = scmp.eq.s32.totalorder %s16, 1
    %p39 = por %p37, %p38
    %p41 = scmp.ne.s32.totalorder %s24, %s40
    %p42 = scmp.eq.s32.totalorder %s16, 0
    %p43 = por %p41, %p42
    %s45 = sadd.s32 %s44, 1
    %p48 = scmp.eq.s32.totalorder %s10, 1
    %p49 = scmp.ne.s32.totalorder %s44, %s46
    %p50 = scmp.eq.s32.totalorder %s10, 0
    %p51 = por %p49, %p50
    %p52 = scmp.ne.s32.totalorder %s44, %s46
    %p53 = scmp.eq.s32.totalorder %s15, 1
    %p54 = por %p52, %p53
    %p55 = scmp.ne.s32.totalorder %s46, %s47
    %p56 = scmp.eq.s32.totalorder %s15, 0
    %p57 = por %p55, %p56
    %p58 = scmp.ne.s32.totalorder %s46, %s47
    %p59 = scmp.eq.s32.totalorder %s16, 1
    %p60 = por %p58, %p59
    %p62 = scmp.ne.s32.totalorder %s47, %s61
    %p63 = scmp.eq.s32.totalorder %s16, 0
    %p64 = por %p62, %p63
    %s65 = ssub.s32 %s10, %s17
    %p66 = scmp.eq.s32.totalorder %s65, 0
    %s68 = sadd.s32 %s67, 1
    %s69 = scalar_select %p66, %s67, %s68
    %p72 = pneg %p66
    %p73 = scmp.eq.s32.totalorder %s10, 1
    %p74 = por %p72, %p73
    %p75 = scmp.ne.s32.totalorder %s67, %s70
    %p76 = scmp.eq.s32.totalorder %s10, 0
    %p77 = por %p75, %p76
    %p78 = scmp.ne.s32.totalorder %s67, %s70
    %p79 = scmp.eq.s32.totalorder %s15, 1
    %p80 = por %p78, %p79
    %p81 = scmp.ne.s32.totalorder %s70, %s71
    %p82 = scmp.eq.s32.totalorder %s15, 0
    %p83 = por %p81, %p82
    %p84 = scmp.ne.s32.totalorder %s70, %s71
    %p85 = scmp.eq.s32.totalorder %s16, 1
    %p86 = por %p84, %p85
    %p88 = scmp.ne.s32.totalorder %s71, %s87
    %p89 = scmp.eq.s32.totalorder %s16, 0
    %p90 = por %p88, %p89
    %s91 = ssub.s32 %s10, %s17
    %p92 = scmp.eq.s32.totalorder %s91, 0
    %s94 = sadd.s32 %s93, 1
    %s95 = scalar_select %p92, %s93, %s94
    %p98 = pneg %p92
    %p99 = scmp.eq.s32.totalorder %s10, 1
    %p100 = por %p98, %p99
    %p101 = scmp.ne.s32.totalorder %s93, %s96
    %p102 = scmp.eq.s32.totalorder %s10, 0
    %p103 = por %p101, %p102
    %p104 = scmp.ne.s32.totalorder %s93, %s96
    %p105 = scmp.eq.s32.totalorder %s15, 1
    %p106 = por %p104, %p105
    %p107 = scmp.ne.s32.totalorder %s96, %s97
    %p108 = scmp.eq.s32.totalorder %s15, 0
    %p109 = por %p107, %p108
    %p110 = scmp.ne.s32.totalorder %s96, %s97
    %p111 = scmp.eq.s32.totalorder %s16, 1
    %p112 = por %p110, %p111
    %p114 = scmp.ne.s32.totalorder %s97, %s113
    %p115 = scmp.eq.s32.totalorder %s16, 0
    %p116 = por %p114, %p115
    %p117 = scmp.le.s32.totalorder 1, %s10
    %p118 = scmp.lt.s32.totalorder %s10, 3
    %p119 = pnand %p117, %p118
    %p120 = pneg %p119
    // Predicated region
    $region9: #{_forward_impl.3} parent=5 // pred_check
      _
    $region10: #{_forward_impl.3} parent=5 // pred_check_branch
      %122 = sbr.rel (%p119) target = $region12
    $region11: #{_forward_impl.3} parent=5 // pred_region
      %s123 = ssub.s32 %s10, 1
      // Predicated region
      $region13: #{_forward_impl.3} parent=11 // pred_check
        %p124 = pneg %p57
      $region14: #{_forward_impl.3} parent=11 // pred_check_branch
        %126 = sbr.rel (%p124) target = $region16
      $region15: #{_forward_impl.3} parent=11 // pred_region
        _
      $region16: #{_forward_impl.3} parent=11 // pred_fallthru
        _
    $region12: #{_forward_impl.3} parent=5 // pred_fallthru
      _
    %p127 = scmp.lt.s32.totalorder %s10, 2
    // Predicated region
    $region17: #{_forward_impl.3} parent=5 // pred_check
      %p128 = pneg %p127
    $region18: #{_forward_impl.3} parent=5 // pred_check_branch
      %130 = sbr.rel (%p128) target = $region20
    $region19: #{_forward_impl.3} parent=5 // pred_region
      // Predicated region
      $region21: #{_forward_impl.3} parent=19 // pred_check
        %p131 = pneg %p30
      $region22: #{_forward_impl.3} parent=19 // pred_check_branch
        %133 = sbr.rel (%p131) target = $region24
      $region23: #{_forward_impl.3} parent=19 // pred_region
        %p134 = scmp.lt.s32.totalorder %s10, 1
        %s135 = scalar_select %p134, %s10, 1
        %s136 = smul.addr %s135, 8
        %s137 = scalar_lea.vmem %s0, %s136
      $region24: #{_forward_impl.3} parent=19 // pred_fallthru
        _
    $region20: #{_forward_impl.3} parent=5 // pred_fallthru
      _
    %p138 = scmp.le.s32.totalorder 1, %s10
    %p139 = scmp.lt.s32.totalorder %s10, 3
    %p140 = pnand %p138, %p139
    %p141 = pneg %p140
    // Predicated region
    $region25: #{_forward_impl.3} parent=5 // pred_check
      _
    $region26: #{_forward_impl.3} parent=5 // pred_check_branch
      %143 = sbr.rel (%p140) target = $region28
    $region27: #{_forward_impl.3} parent=5 // pred_region
      %s144 = ssub.s32 %s10, 1
      %p145 = scmp.lt.s32.totalorder %s15, 1
      %s146 = scalar_select %p145, %s15, 1
      %s147 = smul.addr %s146, 8
      %s148 = scalar_lea.vmem %s0, %s147
      %p149 = pneg %p36
      %p150 = pneg %p33
      %p151 = pneg %p57
      %p152 = pneg %p54
      %p153 = pneg %p83
      %p154 = pneg %p80
      %p155 = scmp.lt.s32.totalorder %s15, 1
      %s156 = scalar_select %p155, %s15, 1
      %s157 = smul.addr %s156, 4
      %s158 = scalar_lea.vmem %s2, %s157
      %p159 = pneg %p109
      %p160 = pneg %p106
      %p161 = scmp.lt.s32.totalorder %s15, 1
      %s162 = scalar_select %p161, %s15, 1
      %s163 = smul.addr %s162, 2
      %s164 = scalar_lea.vmem %s3, %s163
      %p165 = scmp.lt.s32.totalorder %s15, 1
      %s166 = scalar_select %p165, %s15, 1
      %s167 = smul.addr %s166, 8
      %s168 = scalar_lea.vmem %s0, %s167
      %p169 = scmp.lt.s32.totalorder %s15, 1
      %s170 = scalar_select %p169, %s15, 1
      %s171 = smul.addr %s170, 4
      %s172 = scalar_lea.vmem %s2, %s171
      %p173 = scmp.lt.s32.totalorder %s15, 1
      %s174 = scalar_select %p173, %s15, 1
      %s175 = smul.addr %s174, 2
      %s176 = scalar_lea.vmem %s3, %s175
      %v177 = vld [vmem:[%s168] sm:$0xff]
      %v178 = vlaneseq
      %v179 = vshrl.u32 %v178, 7
      %vm180 = vcmp.lt.s32.totalorder %v179, 0
      %v181 = vsub.s32 0, %v179
      %v182 = vsel %vm180, %v181, %v179
      %v183 = vshrl.u32 %v182, 3
      %v184 = vand.u32 %v182, 7
      %v185 = vsub.s32 0, %v184
      %v186 = vsel %vm180, %v185, %v184
      %vm187 = vcmp.ne.s32.totalorder %v186, 0
      %vm188 = vcmp.lt.s32.totalorder %v186, 0
      %vm189 = vmand %vm188, %vm187
      %v190 = vadd.s32 %v186, 8
      %v191 = vsel %vm189, %v190, %v186
      %vm192 = vcmp.gt.s32.totalorder %v191, 0
      %v193 = vrot.slane %v177, 7
      %v194 = vsel %vm192, %v193, 0.0
      %vm195 = vcmp.lt.s32.totalorder %v191, 7
      %v196 = vrot.slane %v177, 1
      %v197 = vsel %vm195, %v196, 0.0
      %v198 = vpack.c.bf16 %v194, %v194
      %v199 = vpack.c.bf16 %v177, %v177
      %v200 = vpack.c.bf16 %v197, %v197
      %v201 = vld [vmem:[%s1] sm:$0xf]
      %v202 = vld [vmem:[%s1 + $0x4] sm:$0xf]
      %v203 = vld [vmem:[%s1 + $0x8] sm:$0xf]
      %v204 = vld [vmem:[%s1 + $0xc] sm:$0xf]
      %v205 = vld [vmem:[%s1 + $0x10] sm:$0xf]
      %v206 = vld [vmem:[%s1 + $0x14] sm:$0xf]
      %v207 = vld [vmem:[%s1 + $0x18] sm:$0xf]
      %v208 = vld [vmem:[%s1 + $0x1c] sm:$0xf]
      %v209 = vld [vmem:[%s1 + $0x20] sm:$0xf]
      %v210 = vld [vmem:[%s1 + $0x24] sm:$0xf]
      %v211 = vld [vmem:[%s1 + $0x28] sm:$0xf]
      %v212 = vld [vmem:[%s1 + $0x2c] sm:$0xf]
      %v213 = vld [vmem:[%s1 + $0x30] sm:$0xf]
      %v214 = vld [vmem:[%s1 + $0x34] sm:$0xf]
      %v215 = vld [vmem:[%s1 + $0x38] sm:$0xf]
      %v216 = vld [vmem:[%s1 + $0x3c] sm:$0xf]
      %v217 = vld [vmem:[%s1 + $0x40] sm:$0xf]
      %v218 = vld [vmem:[%s1 + $0x44] sm:$0xf]
      %v219 = vld [vmem:[%s1 + $0x48] sm:$0xf]
      %v220 = vld [vmem:[%s1 + $0x4c] sm:$0xf]
      %v221 = vld [vmem:[%s1 + $0x50] sm:$0xf]
      %v222 = vld [vmem:[%s1 + $0x54] sm:$0xf]
      %v223 = vld [vmem:[%s1 + $0x58] sm:$0xf]
      %v224 = vld [vmem:[%s1 + $0x5c] sm:$0xf]
      %v225 = vld [vmem:[%s1 + $0x60] sm:$0xf]
      %v226 = vld [vmem:[%s1 + $0x64] sm:$0xf]
      %v227 = vld [vmem:[%s1 + $0x68] sm:$0xf]
      %v228 = vld [vmem:[%s1 + $0x6c] sm:$0xf]
      %v229 = vld [vmem:[%s1 + $0x70] sm:$0xf]
      %v230 = vld [vmem:[%s1 + $0x74] sm:$0xf]
      %v231 = vld [vmem:[%s1 + $0x78] sm:$0xf]
      %v232 = vld [vmem:[%s1 + $0x7c] sm:$0xf]
      %v233 = vld [vmem:[%s1 + $0x80] sm:$0xf]
      %v234 = vld [vmem:[%s1 + $0x84] sm:$0xf]
      %v235 = vld [vmem:[%s1 + $0x88] sm:$0xf]
      %v236 = vld [vmem:[%s1 + $0x8c] sm:$0xf]
      %v237 = vld [vmem:[%s1 + $0x90] sm:$0xf]
      %v238 = vld [vmem:[%s1 + $0x94] sm:$0xf]
      %v239 = vld [vmem:[%s1 + $0x98] sm:$0xf]
      %v240 = vld [vmem:[%s1 + $0x9c] sm:$0xf]
      %v241 = vld [vmem:[%s1 + $0xa0] sm:$0xf]
      %v242 = vld [vmem:[%s1 + $0xa4] sm:$0xf]
      %v243 = vld [vmem:[%s1 + $0xa8] sm:$0xf]
      %v244 = vld [vmem:[%s1 + $0xac] sm:$0xf]
      %v245 = vld [vmem:[%s1 + $0xb0] sm:$0xf]
      %v246 = vld [vmem:[%s1 + $0xb4] sm:$0xf]
      %v247 = vld [vmem:[%s1 + $0xb8] sm:$0xf]
      %v248 = vld [vmem:[%s1 + $0xbc] sm:$0xf]
      %v297 = vunpack.c.l.b16 %v201
      %v298 = vunpack.c.l.b16 %v202
      %v299 = vunpack.c.l.b16 %v203
      %v300 = vunpack.c.l.b16 %v204
      %v301 = vunpack.c.l.b16 %v205
      %v302 = vunpack.c.l.b16 %v206
      %v303 = vunpack.c.l.b16 %v207
      %v304 = vunpack.c.l.b16 %v208
      %v305 = vunpack.c.l.b16 %v209
      %v306 = vunpack.c.l.b16 %v210
      %v307 = vunpack.c.l.b16 %v211
      %v308 = vunpack.c.l.b16 %v212
      %v309 = vunpack.c.l.b16 %v213
      %v310 = vunpack.c.l.b16 %v214
      %v311 = vunpack.c.l.b16 %v215
      %v312 = vunpack.c.l.b16 %v216
      %v313 = vunpack.c.l.b16 %v217
      %v314 = vunpack.c.l.b16 %v218
      %v315 = vunpack.c.l.b16 %v219
      %v316 = vunpack.c.l.b16 %v220
      %v317 = vunpack.c.l.b16 %v221
      %v318 = vunpack.c.l.b16 %v222
      %v319 = vunpack.c.l.b16 %v223
      %v320 = vunpack.c.l.b16 %v224
      %v321 = vunpack.c.l.b16 %v225
      %v322 = vunpack.c.l.b16 %v226
      %v323 = vunpack.c.l.b16 %v227
      %v324 = vunpack.c.l.b16 %v228
      %v325 = vunpack.c.l.b16 %v229
      %v326 = vunpack.c.l.b16 %v230
      %v327 = vunpack.c.l.b16 %v231
      %v328 = vunpack.c.l.b16 %v232
      %v329 = vunpack.c.l.b16 %v233
      %v330 = vunpack.c.l.b16 %v234
      %v331 = vunpack.c.l.b16 %v235
      %v332 = vunpack.c.l.b16 %v236
      %v333 = vunpack.c.l.b16 %v237
      %v334 = vunpack.c.l.b16 %v238
      %v335 = vunpack.c.l.b16 %v239
      %v336 = vunpack.c.l.b16 %v240
      %v337 = vunpack.c.l.b16 %v241
      %v338 = vunpack.c.l.b16 %v242
      %v339 = vunpack.c.l.b16 %v243
      %v340 = vunpack.c.l.b16 %v244
      %v341 = vunpack.c.l.b16 %v245
      %v342 = vunpack.c.l.b16 %v246
      %v343 = vunpack.c.l.b16 %v247
      %v344 = vunpack.c.l.b16 %v248
      %v345 = vpack.c.b16 %v298, %v297
      %v346 = vpack.c.b16 %v300, %v299
      %v347 = vpack.c.b16 %v302, %v301
      %v348 = vpack.c.b16 %v304, %v303
      %v349 = vpack.c.b16 %v306, %v305
      %v350 = vpack.c.b16 %v308, %v307
      %v351 = vpack.c.b16 %v310, %v309
      %v352 = vpack.c.b16 %v312, %v311
      %v353 = vpack.c.b16 %v314, %v313
      %v354 = vpack.c.b16 %v316, %v315
      %v355 = vpack.c.b16 %v318, %v317
      %v356 = vpack.c.b16 %v320, %v319
      %v357 = vpack.c.b16 %v322, %v321
      %v358 = vpack.c.b16 %v324, %v323
      %v359 = vpack.c.b16 %v326, %v325
      %v360 = vpack.c.b16 %v328, %v327
      %v361 = vpack.c.b16 %v330, %v329
      %v362 = vpack.c.b16 %v332, %v331
      %v363 = vpack.c.b16 %v334, %v333
      %v364 = vpack.c.b16 %v336, %v335
      %v365 = vpack.c.b16 %v338, %v337
      %v366 = vpack.c.b16 %v340, %v339
      %v367 = vpack.c.b16 %v342, %v341
      %v368 = vpack.c.b16 %v344, %v343
      %393 = vmatpush.bf16.msra.mxu0 %v352
      %394 = vmatpush.bf16.msra.mxu0 %v351
      %395 = vmatpush.bf16.msra.mxu0 %v350
      %396 = vmatpush.bf16.msra.mxu0 %v349
      %397 = vmatpush.bf16.msra.mxu0 %v348
      %398 = vmatpush.bf16.msra.mxu0 %v347
      %399 = vmatpush.bf16.msra.mxu0 %v346
      %400 = vmatpush.bf16.msra.mxu0 %v345
      %401 = vmatmul.bf16.gmra.mxu0 %v198
      %v402 = vpop.f32.mrf.mxu0
      %v403 = vadd.f32 0.0, %v402
      %v404 = vpop.f32.mrf.mxu0
      %405 = vdwg.mxu0
      %406 = vmatpush.bf16.msra.mxu0 %v360
      %407 = vmatpush.bf16.msra.mxu0 %v359
      %408 = vmatpush.bf16.msra.mxu0 %v358
      %409 = vmatpush.bf16.msra.mxu0 %v357
      %410 = vmatpush.bf16.msra.mxu0 %v356
      %411 = vmatpush.bf16.msra.mxu0 %v355
      %412 = vmatpush.bf16.msra.mxu0 %v354
      %413 = vmatpush.bf16.msra.mxu0 %v353
      %414 = vmatmul.bf16.gmra.mxu0 %v199
      %v415 = vpop.f32.mrf.mxu0
      %v416 = vadd.f32 %v403, %v415
      %v417 = vpop.f32.mrf.mxu0
      %418 = vdwg.mxu0
      %419 = vmatpush.bf16.msra.mxu0 %v368
      %420 = vmatpush.bf16.msra.mxu0 %v367
      %421 = vmatpush.bf16.msra.mxu0 %v366
      %422 = vmatpush.bf16.msra.mxu0 %v365
      %423 = vmatpush.bf16.msra.mxu0 %v364
      %424 = vmatpush.bf16.msra.mxu0 %v363
      %425 = vmatpush.bf16.msra.mxu0 %v362
      %426 = vmatpush.bf16.msra.mxu0 %v361
      %427 = vmatmul.bf16.gmra.mxu0 %v200
      %v428 = vpop.f32.mrf.mxu0
      %v429 = vadd.f32 %v416, %v428
      %v430 = vpop.f32.mrf.mxu0
      %431 = vdwg.mxu0
      %v432 = vrot.slane %v429, 4
      %v433 = vadd.f32 %v429, %v432
      %v434 = vrot.slane %v433, 2
      %v435 = vadd.f32 %v433, %v434
      %v436 = vrot.slane %v435, 1
      %v437 = vadd.f32 %v435, %v436
      %v438 = vmul.f32 %v429, %v429
      %v439 = vrot.slane %v438, 4
      %v440 = vadd.f32 %v438, %v439
      %v441 = vrot.slane %v440, 2
      %v442 = vadd.f32 %v440, %v441
      %v443 = vrot.slane %v442, 1
      %v444 = vadd.f32 %v442, %v443
      %vm445 = vcmask 1040384
      %v446 = vsel %vm445, %v437, %v444
      %447 = vst [vmem:[%s176] sm:$0x3] %v446
      %v448 = vpack.c.bf16 %v429, %v429
      %449 = vst [vmem:[%s172] sm:$0xf] %v448
      %p450 = scmp.lt.s32.totalorder %s15, 1
      %s451 = scalar_select %p450, %s15, 1
      %s452 = smul.addr %s451, 4
      %s453 = scalar_lea.vmem %s2, %s452
      %p454 = scmp.lt.s32.totalorder %s15, 1
      %s455 = scalar_select %p454, %s15, 1
      %s456 = smul.addr %s455, 2
      %s457 = scalar_lea.vmem %s3, %s456
      // Predicated region
      $region29: #{_forward_impl.3} parent=27 // pred_check
        %p458 = pneg %p80
      $region30: #{_forward_impl.3} parent=27 // pred_check_branch
        %460 = sbr.rel (%p458) target = $region32
      $region31: #{_forward_impl.3} parent=27 // pred_region
        _
      $region32: #{_forward_impl.3} parent=27 // pred_fallthru
        _
      // Predicated region
      $region33: #{_forward_impl.3} parent=27 // pred_check
        %p461 = pneg %p106
      $region34: #{_forward_impl.3} parent=27 // pred_check_branch
        %463 = sbr.rel (%p461) target = $region36
      $region35: #{_forward_impl.3} parent=27 // pred_region
        _
      $region36: #{_forward_impl.3} parent=27 // pred_fallthru
        _
    $region28: #{_forward_impl.3} parent=5 // pred_fallthru
      _
    %p464 = scmp.le.s32.totalorder 2, %s10
    // Predicated region
    $region37: #{_forward_impl.3} parent=5 // pred_check
      %p465 = pneg %p464
    $region38: #{_forward_impl.3} parent=5 // pred_check_branch
      %467 = sbr.rel (%p465) target = $region40
    $region39: #{_forward_impl.3} parent=5 // pred_region
      %s468 = ssub.s32 %s10, 2
      // Predicated region
      $region41: #{_forward_impl.3} parent=39 // pred_check
        %p469 = pneg %p86
      $region42: #{_forward_impl.3} parent=39 // pred_check_branch
        %471 = sbr.rel (%p469) target = $region44
      $region43: #{_forward_impl.3} parent=39 // pred_region
        %p472 = scmp.lt.s32.totalorder %s16, 1
        %s473 = scalar_select %p472, %s16, 1
        %s474 = smul.addr %s473, 4
        %s475 = scalar_lea.vmem %s2, %s474
      $region44: #{_forward_impl.3} parent=39 // pred_fallthru
        _
      // Predicated region
      $region45: #{_forward_impl.3} parent=39 // pred_check
        %p476 = pneg %p112
      $region46: #{_forward_impl.3} parent=39 // pred_check_branch
        %478 = sbr.rel (%p476) target = $region48
      $region47: #{_forward_impl.3} parent=39 // pred_region
        %p479 = scmp.lt.s32.totalorder %s16, 1
        %s480 = scalar_select %p479, %s16, 1
        %s481 = smul.addr %s480, 2
        %s482 = scalar_lea.vmem %s3, %s481
      $region48: #{_forward_impl.3} parent=39 // pred_fallthru
        _
    $region40: #{_forward_impl.3} parent=5 // pred_fallthru
      _
  $region6: #{_forward_impl.3} parent=0 // loop_footer
    %s14 = sadd.s32 1, %s10
  $region7: #{_forward_impl.3} parent=0 // loop_footer_branch
    %9 = sbr.rel target = $region3
  $region8: #{_forward_impl.3} parent=0 // loop_exit
    _

// kernel: _forward_impl.5
$region0: #{_forward_impl.5}
  #allocation0 [shape = 'u32[]', space=smem, size = 0x4, offset = 0x4, fixed_abs, tag = 'smem constant byte address 0x4 - core index']
  #allocation1 [shape = 'u32[72,128]{1,0:T(1,128)}', space=vmem, size = 0x9000, scoped, tag = 'internal scratch']
  %s0 = inlined_call_operand.vmem [shape: f32[1,128], index: 0, kind: input, shape index: {}]
  %s1 = inlined_call_operand.vmem [shape: f32[1,128], index: 1, kind: input, shape index: {}]
  %s2 = inlined_call_operand.vmem [shape: bf16[2,8,128], index: 2, kind: input, shape index: {}]
  %s3 = inlined_call_operand.vmem [shape: f32[2,8,128], index: 3, kind: input, shape index: {}]
  %s4 = inlined_call_operand.vmem [shape: f32[2,8,128], index: 4, kind: output, shape index: {}]
  %s5 = sld [smem:[#allocation0]]
  $region49: #{_forward_impl.5} parent=0
    _
  %s7 = ssub.s32 1, %s5
  %s8 = scalar_select 0, %s7, %s5
  loop: start=0, step=1, limit=4
  $region2: #{_forward_impl.5} parent=0 // loop_pre_header
    _
  $region3: #{_forward_impl.5} parent=0 // loop_header
    %s10 = sphi 0, %s14
    %p11 = scmp.ge.s32.totalorder %s10, 4
    %s18 = sphi 0, %s18
    %s20 = sphi 0, %s18
    %s21 = sphi 0, %s20
    %s35 = sphi 0, %s21
    %s39 = sphi 0, %s39
    %s41 = sphi 0, %s39
    %s42 = sphi 0, %s41
    %s56 = sphi 0, %s42
    %s62 = sphi 0, %s64
    %s65 = sphi 0, %s62
    %s66 = sphi 0, %s65
    %s82 = sphi 0, %s66
    %s88 = sphi 0, %s90
    %s91 = sphi 0, %s88
    %s92 = sphi 0, %s91
    %s108 = sphi 0, %s92
    %s114 = sphi 0, %s116
    %s117 = sphi 0, %s114
    %s118 = sphi 0, %s117
    %s134 = sphi 0, %s118
  $region4: #{_forward_impl.5} parent=0 // loop_header_branch
    %13 = sbr.rel (%p11) target = $region8
  $region5: #{_forward_impl.5} parent=0 // loop_body
    %s15 = ssub.s32 %s10, 1
    %s16 = ssub.s32 %s10, 2
    %s17 = sadd.s32 %s10, 1
    %s19 = sadd.s32 %s18, 1
    %p22 = scmp.eq.s32.totalorder %s10, 1
    %p23 = scmp.ne.s32.totalorder %s18, %s20
    %p24 = scmp.eq.s32.totalorder %s10, 0
    %p25 = por %p23, %p24
    %p26 = scmp.ne.s32.totalorder %s18, %s20
    %p27 = scmp.eq.s32.totalorder %s15, 1
    %p28 = por %p26, %p27
    %p29 = scmp.ne.s32.totalorder %s20, %s21
    %p30 = scmp.eq.s32.totalorder %s15, 0
    %p31 = por %p29, %p30
    %p32 = scmp.ne.s32.totalorder %s20, %s21
    %p33 = scmp.eq.s32.totalorder %s16, 1
    %p34 = por %p32, %p33
    %p36 = scmp.ne.s32.totalorder %s21, %s35
    %p37 = scmp.eq.s32.totalorder %s16, 0
    %p38 = por %p36, %p37
    %s40 = sadd.s32 %s39, 1
    %p43 = scmp.eq.s32.totalorder %s10, 1
    %p44 = scmp.ne.s32.totalorder %s39, %s41
    %p45 = scmp.eq.s32.totalorder %s10, 0
    %p46 = por %p44, %p45
    %p47 = scmp.ne.s32.totalorder %s39, %s41
    %p48 = scmp.eq.s32.totalorder %s15, 1
    %p49 = por %p47, %p48
    %p50 = scmp.ne.s32.totalorder %s41, %s42
    %p51 = scmp.eq.s32.totalorder %s15, 0
    %p52 = por %p50, %p51
    %p53 = scmp.ne.s32.totalorder %s41, %s42
    %p54 = scmp.eq.s32.totalorder %s16, 1
    %p55 = por %p53, %p54
    %p57 = scmp.ne.s32.totalorder %s42, %s56
    %p58 = scmp.eq.s32.totalorder %s16, 0
    %p59 = por %p57, %p58
    %s60 = ssub.s32 %s10, %s17
    %p61 = scmp.eq.s32.totalorder %s60, 0
    %s63 = sadd.s32 %s62, 1
    %s64 = scalar_select %p61, %s62, %s63
    %p67 = pneg %p61
    %p68 = scmp.eq.s32.totalorder %s10, 1
    %p69 = por %p67, %p68
    %p70 = scmp.ne.s32.totalorder %s62, %s65
    %p71 = scmp.eq.s32.totalorder %s10, 0
    %p72 = por %p70, %p71
    %p73 = scmp.ne.s32.totalorder %s62, %s65
    %p74 = scmp.eq.s32.totalorder %s15, 1
    %p75 = por %p73, %p74
    %p76 = scmp.ne.s32.totalorder %s65, %s66
    %p77 = scmp.eq.s32.totalorder %s15, 0
    %p78 = por %p76, %p77
    %p79 = scmp.ne.s32.totalorder %s65, %s66
    %p80 = scmp.eq.s32.totalorder %s16, 1
    %p81 = por %p79, %p80
    %p83 = scmp.ne.s32.totalorder %s66, %s82
    %p84 = scmp.eq.s32.totalorder %s16, 0
    %p85 = por %p83, %p84
    %s86 = ssub.s32 %s10, %s17
    %p87 = scmp.eq.s32.totalorder %s86, 0
    %s89 = sadd.s32 %s88, 1
    %s90 = scalar_select %p87, %s88, %s89
    %p93 = pneg %p87
    %p94 = scmp.eq.s32.totalorder %s10, 1
    %p95 = por %p93, %p94
    %p96 = scmp.ne.s32.totalorder %s88, %s91
    %p97 = scmp.eq.s32.totalorder %s10, 0
    %p98 = por %p96, %p97
    %p99 = scmp.ne.s32.totalorder %s88, %s91
    %p100 = scmp.eq.s32.totalorder %s15, 1
    %p101 = por %p99, %p100
    %p102 = scmp.ne.s32.totalorder %s91, %s92
    %p103 = scmp.eq.s32.totalorder %s15, 0
    %p104 = por %p102, %p103
    %p105 = scmp.ne.s32.totalorder %s91, %s92
    %p106 = scmp.eq.s32.totalorder %s16, 1
    %p107 = por %p105, %p106
    %p109 = scmp.ne.s32.totalorder %s92, %s108
    %p110 = scmp.eq.s32.totalorder %s16, 0
    %p111 = por %p109, %p110
    %s112 = ssub.s32 %s10, %s17
    %p113 = scmp.eq.s32.totalorder %s112, 0
    %s115 = sadd.s32 %s114, 1
    %s116 = scalar_select %p113, %s114, %s115
    %p119 = pneg %p113
    %p120 = scmp.eq.s32.totalorder %s10, 1
    %p121 = por %p119, %p120
    %p122 = scmp.ne.s32.totalorder %s114, %s117
    %p123 = scmp.eq.s32.totalorder %s10, 0
    %p124 = por %p122, %p123
    %p125 = scmp.ne.s32.totalorder %s114, %s117
    %p126 = scmp.eq.s32.totalorder %s15, 1
    %p127 = por %p125, %p126
    %p128 = scmp.ne.s32.totalorder %s117, %s118
    %p129 = scmp.eq.s32.totalorder %s15, 0
    %p130 = por %p128, %p129
    %p131 = scmp.ne.s32.totalorder %s117, %s118
    %p132 = scmp.eq.s32.totalorder %s16, 1
    %p133 = por %p131, %p132
    %p135 = scmp.ne.s32.totalorder %s118, %s134
    %p136 = scmp.eq.s32.totalorder %s16, 0
    %p137 = por %p135, %p136
    %p138 = scmp.le.s32.totalorder 1, %s10
    %p139 = scmp.lt.s32.totalorder %s10, 3
    %p140 = pnand %p138, %p139
    %p141 = pneg %p140
    // Predicated region
    $region9: #{_forward_impl.5} parent=5 // pred_check
      _
    $region10: #{_forward_impl.5} parent=5 // pred_check_branch
      %143 = sbr.rel (%p140) target = $region12
    $region11: #{_forward_impl.5} parent=5 // pred_region
      %s144 = ssub.s32 %s10, 1
      // Predicated region
      $region13: #{_forward_impl.5} parent=11 // pred_check
        %p145 = pneg %p31
      $region14: #{_forward_impl.5} parent=11 // pred_check_branch
        %147 = sbr.rel (%p145) target = $region16
      $region15: #{_forward_impl.5} parent=11 // pred_region
        _
      $region16: #{_forward_impl.5} parent=11 // pred_fallthru
        _
      // Predicated region
      $region17: #{_forward_impl.5} parent=11 // pred_check
        %p148 = pneg %p52
      $region18: #{_forward_impl.5} parent=11 // pred_check_branch
        %150 = sbr.rel (%p148) target = $region20
      $region19: #{_forward_impl.5} parent=11 // pred_region
        _
      $region20: #{_forward_impl.5} parent=11 // pred_fallthru
        _
    $region12: #{_forward_impl.5} parent=5 // pred_fallthru
      _
    %p151 = scmp.lt.s32.totalorder %s10, 2
    // Predicated region
    $region21: #{_forward_impl.5} parent=5 // pred_check
      %p152 = pneg %p151
    $region22: #{_forward_impl.5} parent=5 // pred_check_branch
      %154 = sbr.rel (%p152) target = $region24
    $region23: #{_forward_impl.5} parent=5 // pred_region
      // Predicated region
      $region25: #{_forward_impl.5} parent=23 // pred_check
        %p155 = pneg %p72
      $region26: #{_forward_impl.5} parent=23 // pred_check_branch
        %157 = sbr.rel (%p155) target = $region28
      $region27: #{_forward_impl.5} parent=23 // pred_region
        %p158 = scmp.lt.s32.totalorder %s10, 1
        %s159 = scalar_select %p158, %s10, 1
        %s160 = smul.addr %s159, 4
        %s161 = scalar_lea.vmem %s2, %s160
      $region28: #{_forward_impl.5} parent=23 // pred_fallthru
        _
      // Predicated region
      $region29: #{_forward_impl.5} parent=23 // pred_check
        %p162 = pneg %p98
      $region30: #{_forward_impl.5} parent=23 // pred_check_branch
        %164 = sbr.rel (%p162) target = $region32
      $region31: #{_forward_impl.5} parent=23 // pred_region
        %p165 = scmp.lt.s32.totalorder %s10, 1
        %s166 = scalar_select %p165, %s10, 1
        %s167 = smul.addr %s166, 8
        %s168 = scalar_lea.vmem %s3, %s167
      $region32: #{_forward_impl.5} parent=23 // pred_fallthru
        _
    $region24: #{_forward_impl.5} parent=5 // pred_fallthru
      _
    %p169 = scmp.le.s32.totalorder 1, %s10
    %p170 = scmp.lt.s32.totalorder %s10, 3
    %p171 = pnand %p169, %p170
    %p172 = pneg %p171
    // Predicated region
    $region33: #{_forward_impl.5} parent=5 // pred_check
      _
    $region34: #{_forward_impl.5} parent=5 // pred_check_branch
      %174 = sbr.rel (%p171) target = $region36
    $region35: #{_forward_impl.5} parent=5 // pred_region
      %s175 = ssub.s32 %s10, 1
      %p176 = pneg %p31
      %p177 = pneg %p28
      %p178 = pneg %p52
      %p179 = pneg %p49
      %p180 = scmp.lt.s32.totalorder %s15, 1
      %s181 = scalar_select %p180, %s15, 1
      %s182 = smul.addr %s181, 4
      %s183 = scalar_lea.vmem %s2, %s182
      %p184 = pneg %p78
      %p185 = pneg %p75
      %p186 = scmp.lt.s32.totalorder %s15, 1
      %s187 = scalar_select %p186, %s15, 1
      %s188 = smul.addr %s187, 8
      %s189 = scalar_lea.vmem %s3, %s188
      %p190 = pneg %p104
      %p191 = pneg %p101
      %p192 = pneg %p130
      %p193 = pneg %p127
      %p194 = scmp.lt.s32.totalorder %s15, 1
      %s195 = scalar_select %p194, %s15, 1
      %s196 = smul.addr %s195, 8
      %s197 = scalar_lea.vmem %s4, %s196
      %p198 = scmp.lt.s32.totalorder %s15, 1
      %s199 = scalar_select %p198, %s15, 1
      %s200 = smul.addr %s199, 4
      %s201 = scalar_lea.vmem %s2, %s200
      %p202 = scmp.lt.s32.totalorder %s15, 1
      %s203 = scalar_select %p202, %s15, 1
      %s204 = smul.addr %s203, 8
      %s205 = scalar_lea.vmem %s3, %s204
      %p206 = scmp.lt.s32.totalorder %s15, 1
      %s207 = scalar_select %p206, %s15, 1
      %s208 = smul.addr %s207, 8
      %s209 = scalar_lea.vmem %s4, %s208
      %v210 = vld [vmem:[%s0] sm:$0x1]
      %v211 = vld [vmem:[%s1] sm:$0x1]
      %v212 = vld [vmem:[%s201] sm:$0xf]
      %v213 = vunpack.c.l.bf16 %v212
      %v215 = vperm.slane %v210, 0
      %v217 = vmul.f32 %v213, %v215
      %v219 = vperm.slane %v211, 0
      %v221 = vadd.f32 %v217, %v219
      %v222 = vld [vmem:[%s205] sm:$0xff]
      %v223 = vadd.f32 %v221, %v222
      %v224 = vmax.f32 %v223, 0.0
      %225 = vst [vmem:[%s209] sm:$0xff] %v224
      %p226 = scmp.lt.s32.totalorder %s15, 1
      %s227 = scalar_select %p226, %s15, 1
      %s228 = smul.addr %s227, 8
      %s229 = scalar_lea.vmem %s4, %s228
      // Predicated region
      $region37: #{_forward_impl.5} parent=35 // pred_check
        %p230 = pneg %p127
      $region38: #{_forward_impl.5} parent=35 // pred_check_branch
        %232 = sbr.rel (%p230) target = $region40
      $region39: #{_forward_impl.5} parent=35 // pred_region
        _
      $region40: #{_forward_impl.5} parent=35 // pred_fallthru
        _
    $region36: #{_forward_impl.5} parent=5 // pred_fallthru
      _
    %p233 = scmp.le.s32.totalorder 2, %s10
    // Predicated region
    $region41: #{_forward_impl.5} parent=5 // pred_check
      %p234 = pneg %p233
    $region42: #{_forward_impl.5} parent=5 // pred_check_branch
      %236 = sbr.rel (%p234) target = $region44
    $region43: #{_forward_impl.5} parent=5 // pred_region
      %s237 = ssub.s32 %s10, 2
      // Predicated region
      $region45: #{_forward_impl.5} parent=43 // pred_check
        %p238 = pneg %p133
      $region46: #{_forward_impl.5} parent=43 // pred_check_branch
        %240 = sbr.rel (%p238) target = $region48
      $region47: #{_forward_impl.5} parent=43 // pred_region
        %p241 = scmp.lt.s32.totalorder %s16, 1
        %s242 = scalar_select %p241, %s16, 1
        %s243 = smul.addr %s242, 8
        %s244 = scalar_lea.vmem %s4, %s243
      $region48: #{_forward_impl.5} parent=43 // pred_fallthru
        _
    $region44: #{_forward_impl.5} parent=5 // pred_fallthru
      _
  $region6: #{_forward_impl.5} parent=0 // loop_footer
    %s14 = sadd.s32 1, %s10
  $region7: #{_forward_impl.5} parent=0 // loop_footer_branch
    %9 = sbr.rel target = $region3
  $region8: #{_forward_impl.5} parent=0 // loop_exit
    _

// kernel: _forward_impl.4
$region0: #{_forward_impl.4}
  #allocation0 [shape = 'u32[]', space=smem, size = 0x4, offset = 0x4, fixed_abs, tag = 'smem constant byte address 0x4 - core index']
  #allocation1 [shape = 'u32[72,128]{1,0:T(1,128)}', space=vmem, size = 0x9000, scoped, tag = 'internal scratch']
  %s0 = inlined_call_operand.vmem [shape: f32[1,128], index: 0, kind: input, shape index: {}]
  %s1 = inlined_call_operand.vmem [shape: f32[1,128], index: 1, kind: input, shape index: {}]
  %s2 = inlined_call_operand.vmem [shape: bf16[2,8,128], index: 2, kind: input, shape index: {}]
  %s3 = inlined_call_operand.vmem [shape: bf16[384,128], index: 3, kind: input, shape index: {}]
  %s4 = inlined_call_operand.vmem [shape: bf16[2,8,128], index: 4, kind: output, shape index: {0}]
  %s5 = inlined_call_operand.vmem [shape: f32[2,2,128], index: 5, kind: output, shape index: {1}]
  %6 = xla_tuple %s4, %s5
  %s7 = sld [smem:[#allocation0]]
  $region57: #{_forward_impl.4} parent=0
    _
  %s9 = ssub.s32 1, %s7
  %s10 = scalar_select 0, %s9, %s7
  loop: start=0, step=1, limit=4
  $region2: #{_forward_impl.4} parent=0 // loop_pre_header
    _
  $region3: #{_forward_impl.4} parent=0 // loop_header
    %s12 = sphi 0, %s16
    %p13 = scmp.ge.s32.totalorder %s12, 4
    %s20 = sphi 0, %s20
    %s22 = sphi 0, %s20
    %s23 = sphi 0, %s22
    %s37 = sphi 0, %s23
    %s41 = sphi 0, %s41
    %s43 = sphi 0, %s41
    %s44 = sphi 0, %s43
    %s58 = sphi 0, %s44
    %s64 = sphi 0, %s66
    %s67 = sphi 0, %s64
    %s68 = sphi 0, %s67
    %s84 = sphi 0, %s68
    %s88 = sphi 0, %s88
    %s90 = sphi 0, %s88
    %s91 = sphi 0, %s90
    %s105 = sphi 0, %s91
    %s111 = sphi 0, %s113
    %s114 = sphi 0, %s111
    %s115 = sphi 0, %s114
    %s131 = sphi 0, %s115
    %s137 = sphi 0, %s139
    %s140 = sphi 0, %s137
    %s141 = sphi 0, %s140
    %s157 = sphi 0, %s141
  $region4: #{_forward_impl.4} parent=0 // loop_header_branch
    %15 = sbr.rel (%p13) target = $region8
  $region5: #{_forward_impl.4} parent=0 // loop_body
    %s17 = ssub.s32 %s12, 1
    %s18 = ssub.s32 %s12, 2
    %s19 = sadd.s32 %s12, 1
    %s21 = sadd.s32 %s20, 1
    %p24 = scmp.eq.s32.totalorder %s12, 1
    %p25 = scmp.ne.s32.totalorder %s20, %s22
    %p26 = scmp.eq.s32.totalorder %s12, 0
    %p27 = por %p25, %p26
    %p28 = scmp.ne.s32.totalorder %s20, %s22
    %p29 = scmp.eq.s32.totalorder %s17, 1
    %p30 = por %p28, %p29
    %p31 = scmp.ne.s32.totalorder %s22, %s23
    %p32 = scmp.eq.s32.totalorder %s17, 0
    %p33 = por %p31, %p32
    %p34 = scmp.ne.s32.totalorder %s22, %s23
    %p35 = scmp.eq.s32.totalorder %s18, 1
    %p36 = por %p34, %p35
    %p38 = scmp.ne.s32.totalorder %s23, %s37
    %p39 = scmp.eq.s32.totalorder %s18, 0
    %p40 = por %p38, %p39
    %s42 = sadd.s32 %s41, 1
    %p45 = scmp.eq.s32.totalorder %s12, 1
    %p46 = scmp.ne.s32.totalorder %s41, %s43
    %p47 = scmp.eq.s32.totalorder %s12, 0
    %p48 = por %p46, %p47
    %p49 = scmp.ne.s32.totalorder %s41, %s43
    %p50 = scmp.eq.s32.totalorder %s17, 1
    %p51 = por %p49, %p50
    %p52 = scmp.ne.s32.totalorder %s43, %s44
    %p53 = scmp.eq.s32.totalorder %s17, 0
    %p54 = por %p52, %p53
    %p55 = scmp.ne.s32.totalorder %s43, %s44
    %p56 = scmp.eq.s32.totalorder %s18, 1
    %p57 = por %p55, %p56
    %p59 = scmp.ne.s32.totalorder %s44, %s58
    %p60 = scmp.eq.s32.totalorder %s18, 0
    %p61 = por %p59, %p60
    %s62 = ssub.s32 %s12, %s19
    %p63 = scmp.eq.s32.totalorder %s62, 0
    %s65 = sadd.s32 %s64, 1
    %s66 = scalar_select %p63, %s64, %s65
    %p69 = pneg %p63
    %p70 = scmp.eq.s32.totalorder %s12, 1
    %p71 = por %p69, %p70
    %p72 = scmp.ne.s32.totalorder %s64, %s67
    %p73 = scmp.eq.s32.totalorder %s12, 0
    %p74 = por %p72, %p73
    %p75 = scmp.ne.s32.totalorder %s64, %s67
    %p76 = scmp.eq.s32.totalorder %s17, 1
    %p77 = por %p75, %p76
    %p78 = scmp.ne.s32.totalorder %s67, %s68
    %p79 = scmp.eq.s32.totalorder %s17, 0
    %p80 = por %p78, %p79
    %p81 = scmp.ne.s32.totalorder %s67, %s68
    %p82 = scmp.eq.s32.totalorder %s18, 1
    %p83 = por %p81, %p82
    %p85 = scmp.ne.s32.totalorder %s68, %s84
    %p86 = scmp.eq.s32.totalorder %s18, 0
    %p87 = por %p85, %p86
    %s89 = sadd.s32 %s88, 1
    %p92 = scmp.eq.s32.totalorder %s12, 1
    %p93 = scmp.ne.s32.totalorder %s88, %s90
    %p94 = scmp.eq.s32.totalorder %s12, 0
    %p95 = por %p93, %p94
    %p96 = scmp.ne.s32.totalorder %s88, %s90
    %p97 = scmp.eq.s32.totalorder %s17, 1
    %p98 = por %p96, %p97
    %p99 = scmp.ne.s32.totalorder %s90, %s91
    %p100 = scmp.eq.s32.totalorder %s17, 0
    %p101 = por %p99, %p100
    %p102 = scmp.ne.s32.totalorder %s90, %s91
    %p103 = scmp.eq.s32.totalorder %s18, 1
    %p104 = por %p102, %p103
    %p106 = scmp.ne.s32.totalorder %s91, %s105
    %p107 = scmp.eq.s32.totalorder %s18, 0
    %p108 = por %p106, %p107
    %s109 = ssub.s32 %s12, %s19
    %p110 = scmp.eq.s32.totalorder %s109, 0
    %s112 = sadd.s32 %s111, 1
    %s113 = scalar_select %p110, %s111, %s112
    %p116 = pneg %p110
    %p117 = scmp.eq.s32.totalorder %s12, 1
    %p118 = por %p116, %p117
    %p119 = scmp.ne.s32.totalorder %s111, %s114
    %p120 = scmp.eq.s32.totalorder %s12, 0
    %p121 = por %p119, %p120
    %p122 = scmp.ne.s32.totalorder %s111, %s114
    %p123 = scmp.eq.s32.totalorder %s17, 1
    %p124 = por %p122, %p123
    %p125 = scmp.ne.s32.totalorder %s114, %s115
    %p126 = scmp.eq.s32.totalorder %s17, 0
    %p127 = por %p125, %p126
    %p128 = scmp.ne.s32.totalorder %s114, %s115
    %p129 = scmp.eq.s32.totalorder %s18, 1
    %p130 = por %p128, %p129
    %p132 = scmp.ne.s32.totalorder %s115, %s131
    %p133 = scmp.eq.s32.totalorder %s18, 0
    %p134 = por %p132, %p133
    %s135 = ssub.s32 %s12, %s19
    %p136 = scmp.eq.s32.totalorder %s135, 0
    %s138 = sadd.s32 %s137, 1
    %s139 = scalar_select %p136, %s137, %s138
    %p142 = pneg %p136
    %p143 = scmp.eq.s32.totalorder %s12, 1
    %p144 = por %p142, %p143
    %p145 = scmp.ne.s32.totalorder %s137, %s140
    %p146 = scmp.eq.s32.totalorder %s12, 0
    %p147 = por %p145, %p146
    %p148 = scmp.ne.s32.totalorder %s137, %s140
    %p149 = scmp.eq.s32.totalorder %s17, 1
    %p150 = por %p148, %p149
    %p151 = scmp.ne.s32.totalorder %s140, %s141
    %p152 = scmp.eq.s32.totalorder %s17, 0
    %p153 = por %p151, %p152
    %p154 = scmp.ne.s32.totalorder %s140, %s141
    %p155 = scmp.eq.s32.totalorder %s18, 1
    %p156 = por %p154, %p155
    %p158 = scmp.ne.s32.totalorder %s141, %s157
    %p159 = scmp.eq.s32.totalorder %s18, 0
    %p160 = por %p158, %p159
    %p161 = scmp.le.s32.totalorder 1, %s12
    %p162 = scmp.lt.s32.totalorder %s12, 3
    %p163 = pnand %p161, %p162
    %p164 = pneg %p163
    // Predicated region
    $region9: #{_forward_impl.4} parent=5 // pred_check
      _
    $region10: #{_forward_impl.4} parent=5 // pred_check_branch
      %166 = sbr.rel (%p163) target = $region12
    $region11: #{_forward_impl.4} parent=5 // pred_region
      %s167 = ssub.s32 %s12, 1
      // Predicated region
      $region13: #{_forward_impl.4} parent=11 // pred_check
        %p168 = pneg %p33
      $region14: #{_forward_impl.4} parent=11 // pred_check_branch
        %170 = sbr.rel (%p168) target = $region16
      $region15: #{_forward_impl.4} parent=11 // pred_region
        _
      $region16: #{_forward_impl.4} parent=11 // pred_fallthru
        _
      // Predicated region
      $region17: #{_forward_impl.4} parent=11 // pred_check
        %p171 = pneg %p54
      $region18: #{_forward_impl.4} parent=11 // pred_check_branch
        %173 = sbr.rel (%p171) target = $region20
      $region19: #{_forward_impl.4} parent=11 // pred_region
        _
      $region20: #{_forward_impl.4} parent=11 // pred_fallthru
        _
      // Predicated region
      $region21: #{_forward_impl.4} parent=11 // pred_check
        %p174 = pneg %p101
      $region22: #{_forward_impl.4} parent=11 // pred_check_branch
        %176 = sbr.rel (%p174) target = $region24
      $region23: #{_forward_impl.4} parent=11 // pred_region
        _
      $region24: #{_forward_impl.4} parent=11 // pred_fallthru
        _
    $region12: #{_forward_impl.4} parent=5 // pred_fallthru
      _
    %p177 = scmp.lt.s32.totalorder %s12, 2
    // Predicated region
    $region25: #{_forward_impl.4} parent=5 // pred_check
      %p178 = pneg %p177
    $region26: #{_forward_impl.4} parent=5 // pred_check_branch
      %180 = sbr.rel (%p178) target = $region28
    $region27: #{_forward_impl.4} parent=5 // pred_region
      // Predicated region
      $region29: #{_forward_impl.4} parent=27 // pred_check
        %p181 = pneg %p74
      $region30: #{_forward_impl.4} parent=27 // pred_check_branch
        %183 = sbr.rel (%p181) target = $region32
      $region31: #{_forward_impl.4} parent=27 // pred_region
        %p184 = scmp.lt.s32.totalorder %s12, 1
        %s185 = scalar_select %p184, %s12, 1
        %s186 = smul.addr %s185, 4
        %s187 = scalar_lea.vmem %s2, %s186
      $region32: #{_forward_impl.4} parent=27 // pred_fallthru
        _
    $region28: #{_forward_impl.4} parent=5 // pred_fallthru
      _
    %p188 = scmp.le.s32.totalorder 1, %s12
    %p189 = scmp.lt.s32.totalorder %s12, 3
    %p190 = pnand %p188, %p189
    %p191 = pneg %p190
    // Predicated region
    $region33: #{_forward_impl.4} parent=5 // pred_check
      _
    $region34: #{_forward_impl.4} parent=5 // pred_check_branch
      %193 = sbr.rel (%p190) target = $region36
    $region35: #{_forward_impl.4} parent=5 // pred_region
      %s194 = ssub.s32 %s12, 1
      %p195 = pneg %p33
      %p196 = pneg %p30
      %p197 = pneg %p54
      %p198 = pneg %p51
      %p199 = scmp.lt.s32.totalorder %s17, 1
      %s200 = scalar_select %p199, %s17, 1
      %s201 = smul.addr %s200, 4
      %s202 = scalar_lea.vmem %s2, %s201
      %p203 = pneg %p80
      %p204 = pneg %p77
      %p205 = pneg %p101
      %p206 = pneg %p98
      %p207 = pneg %p127
      %p208 = pneg %p124
      %p209 = scmp.lt.s32.totalorder %s17, 1
      %s210 = scalar_select %p209, %s17, 1
      %s211 = smul.addr %s210, 4
      %s212 = scalar_lea.vmem %s4, %s211
      %p213 = pneg %p153
      %p214 = pneg %p150
      %p215 = scmp.lt.s32.totalorder %s17, 1
      %s216 = scalar_select %p215, %s17, 1
      %s217 = smul.addr %s216, 2
      %s218 = scalar_lea.vmem %s5, %s217
      %p219 = scmp.lt.s32.totalorder %s17, 1
      %s220 = scalar_select %p219, %s17, 1
      %s221 = smul.addr %s220, 4
      %s222 = scalar_lea.vmem %s2, %s221
      %p223 = scmp.lt.s32.totalorder %s17, 1
      %s224 = scalar_select %p223, %s17, 1
      %s225 = smul.addr %s224, 4
      %s226 = scalar_lea.vmem %s4, %s225
      %p227 = scmp.lt.s32.totalorder %s17, 1
      %s228 = scalar_select %p227, %s17, 1
      %s229 = smul.addr %s228, 2
      %s230 = scalar_lea.vmem %s5, %s229
      %v231 = vld [vmem:[%s222] sm:$0xf]
      %v232 = vunpack.c.l.bf16 %v231
      %v233 = vld [vmem:[%s0] sm:$0x1]
      %v235 = vperm.slane %v233, 0
      %v237 = vmul.f32 %v232, %v235
      %v238 = vld [vmem:[%s1] sm:$0x1]
      %v240 = vperm.slane %v238, 0
      %v242 = vadd.f32 %v237, %v240
      %v243 = vmax.f32 %v242, 0.0
      %v244 = vlaneseq
      %v245 = vshrl.u32 %v244, 7
      %vm246 = vcmp.lt.s32.totalorder %v245, 0
      %v247 = vsub.s32 0, %v245
      %v248 = vsel %vm246, %v247, %v245
      %v249 = vshrl.u32 %v248, 3
      %v250 = vand.u32 %v248, 7
      %v251 = vsub.s32 0, %v250
      %v252 = vsel %vm246, %v251, %v250
      %vm253 = vcmp.ne.s32.totalorder %v252, 0
      %vm254 = vcmp.lt.s32.totalorder %v252, 0
      %vm255 = vmand %vm254, %vm253
      %v256 = vadd.s32 %v252, 8
      %v257 = vsel %vm255, %v256, %v252
      %vm258 = vcmp.gt.s32.totalorder %v257, 0
      %v259 = vrot.slane %v243, 7
      %v260 = vsel %vm258, %v259, 0.0
      %vm261 = vcmp.lt.s32.totalorder %v257, 7
      %v262 = vrot.slane %v243, 1
      %v263 = vsel %vm261, %v262, 0.0
      %v264 = vpack.c.bf16 %v260, %v260
      %v265 = vpack.c.bf16 %v243, %v243
      %v266 = vpack.c.bf16 %v263, %v263
      %v267 = vld [vmem:[%s3] sm:$0xf]
      %v268 = vld [vmem:[%s3 + $0x4] sm:$0xf]
      %v269 = vld [vmem:[%s3 + $0x8] sm:$0xf]
      %v270 = vld [vmem:[%s3 + $0xc] sm:$0xf]
      %v271 = vld [vmem:[%s3 + $0x10] sm:$0xf]
      %v272 = vld [vmem:[%s3 + $0x14] sm:$0xf]
      %v273 = vld [vmem:[%s3 + $0x18] sm:$0xf]
      %v274 = vld [vmem:[%s3 + $0x1c] sm:$0xf]
      %v275 = vld [vmem:[%s3 + $0x20] sm:$0xf]
      %v276 = vld [vmem:[%s3 + $0x24] sm:$0xf]
      %v277 = vld [vmem:[%s3 + $0x28] sm:$0xf]
      %v278 = vld [vmem:[%s3 + $0x2c] sm:$0xf]
      %v279 = vld [vmem:[%s3 + $0x30] sm:$0xf]
      %v280 = vld [vmem:[%s3 + $0x34] sm:$0xf]
      %v281 = vld [vmem:[%s3 + $0x38] sm:$0xf]
      %v282 = vld [vmem:[%s3 + $0x3c] sm:$0xf]
      %v283 = vld [vmem:[%s3 + $0x40] sm:$0xf]
      %v284 = vld [vmem:[%s3 + $0x44] sm:$0xf]
      %v285 = vld [vmem:[%s3 + $0x48] sm:$0xf]
      %v286 = vld [vmem:[%s3 + $0x4c] sm:$0xf]
      %v287 = vld [vmem:[%s3 + $0x50] sm:$0xf]
      %v288 = vld [vmem:[%s3 + $0x54] sm:$0xf]
      %v289 = vld [vmem:[%s3 + $0x58] sm:$0xf]
      %v290 = vld [vmem:[%s3 + $0x5c] sm:$0xf]
      %v291 = vld [vmem:[%s3 + $0x60] sm:$0xf]
      %v292 = vld [vmem:[%s3 + $0x64] sm:$0xf]
      %v293 = vld [vmem:[%s3 + $0x68] sm:$0xf]
      %v294 = vld [vmem:[%s3 + $0x6c] sm:$0xf]
      %v295 = vld [vmem:[%s3 + $0x70] sm:$0xf]
      %v296 = vld [vmem:[%s3 + $0x74] sm:$0xf]
      %v297 = vld [vmem:[%s3 + $0x78] sm:$0xf]
      %v298 = vld [vmem:[%s3 + $0x7c] sm:$0xf]
      %v299 = vld [vmem:[%s3 + $0x80] sm:$0xf]
      %v300 = vld [vmem:[%s3 + $0x84] sm:$0xf]
      %v301 = vld [vmem:[%s3 + $0x88] sm:$0xf]
      %v302 = vld [vmem:[%s3 + $0x8c] sm:$0xf]
      %v303 = vld [vmem:[%s3 + $0x90] sm:$0xf]
      %v304 = vld [vmem:[%s3 + $0x94] sm:$0xf]
      %v305 = vld [vmem:[%s3 + $0x98] sm:$0xf]
      %v306 = vld [vmem:[%s3 + $0x9c] sm:$0xf]
      %v307 = vld [vmem:[%s3 + $0xa0] sm:$0xf]
      %v308 = vld [vmem:[%s3 + $0xa4] sm:$0xf]
      %v309 = vld [vmem:[%s3 + $0xa8] sm:$0xf]
      %v310 = vld [vmem:[%s3 + $0xac] sm:$0xf]
      %v311 = vld [vmem:[%s3 + $0xb0] sm:$0xf]
      %v312 = vld [vmem:[%s3 + $0xb4] sm:$0xf]
      %v313 = vld [vmem:[%s3 + $0xb8] sm:$0xf]
      %v314 = vld [vmem:[%s3 + $0xbc] sm:$0xf]
      %v363 = vunpack.c.l.b16 %v267
      %v364 = vunpack.c.l.b16 %v268
      %v365 = vunpack.c.l.b16 %v269
      %v366 = vunpack.c.l.b16 %v270
      %v367 = vunpack.c.l.b16 %v271
      %v368 = vunpack.c.l.b16 %v272
      %v369 = vunpack.c.l.b16 %v273
      %v370 = vunpack.c.l.b16 %v274
      %v371 = vunpack.c.l.b16 %v275
      %v372 = vunpack.c.l.b16 %v276
      %v373 = vunpack.c.l.b16 %v277
      %v374 = vunpack.c.l.b16 %v278
      %v375 = vunpack.c.l.b16 %v279
      %v376 = vunpack.c.l.b16 %v280
      %v377 = vunpack.c.l.b16 %v281
      %v378 = vunpack.c.l.b16 %v282
      %v379 = vunpack.c.l.b16 %v283
      %v380 = vunpack.c.l.b16 %v284
      %v381 = vunpack.c.l.b16 %v285
      %v382 = vunpack.c.l.b16 %v286
      %v383 = vunpack.c.l.b16 %v287
      %v384 = vunpack.c.l.b16 %v288
      %v385 = vunpack.c.l.b16 %v289
      %v386 = vunpack.c.l.b16 %v290
      %v387 = vunpack.c.l.b16 %v291
      %v388 = vunpack.c.l.b16 %v292
      %v389 = vunpack.c.l.b16 %v293
      %v390 = vunpack.c.l.b16 %v294
      %v391 = vunpack.c.l.b16 %v295
      %v392 = vunpack.c.l.b16 %v296
      %v393 = vunpack.c.l.b16 %v297
      %v394 = vunpack.c.l.b16 %v298
      %v395 = vunpack.c.l.b16 %v299
      %v396 = vunpack.c.l.b16 %v300
      %v397 = vunpack.c.l.b16 %v301
      %v398 = vunpack.c.l.b16 %v302
      %v399 = vunpack.c.l.b16 %v303
      %v400 = vunpack.c.l.b16 %v304
      %v401 = vunpack.c.l.b16 %v305
      %v402 = vunpack.c.l.b16 %v306
      %v403 = vunpack.c.l.b16 %v307
      %v404 = vunpack.c.l.b16 %v308
      %v405 = vunpack.c.l.b16 %v309
      %v406 = vunpack.c.l.b16 %v310
      %v407 = vunpack.c.l.b16 %v311
      %v408 = vunpack.c.l.b16 %v312
      %v409 = vunpack.c.l.b16 %v313
      %v410 = vunpack.c.l.b16 %v314
      %v411 = vpack.c.b16 %v364, %v363
      %v412 = vpack.c.b16 %v366, %v365
      %v413 = vpack.c.b16 %v368, %v367
      %v414 = vpack.c.b16 %v370, %v369
      %v415 = vpack.c.b16 %v372, %v371
      %v416 = vpack.c.b16 %v374, %v373
      %v417 = vpack.c.b16 %v376, %v375
      %v418 = vpack.c.b16 %v378, %v377
      %v419 = vpack.c.b16 %v380, %v379
      %v420 = vpack.c.b16 %v382, %v381
      %v421 = vpack.c.b16 %v384, %v383
      %v422 = vpack.c.b16 %v386, %v385
      %v423 = vpack.c.b16 %v388, %v387
      %v424 = vpack.c.b16 %v390, %v389
      %v425 = vpack.c.b16 %v392, %v391
      %v426 = vpack.c.b16 %v394, %v393
      %v427 = vpack.c.b16 %v396, %v395
      %v428 = vpack.c.b16 %v398, %v397
      %v429 = vpack.c.b16 %v400, %v399
      %v430 = vpack.c.b16 %v402, %v401
      %v431 = vpack.c.b16 %v404, %v403
      %v432 = vpack.c.b16 %v406, %v405
      %v433 = vpack.c.b16 %v408, %v407
      %v434 = vpack.c.b16 %v410, %v409
      %459 = vmatpush.bf16.msra.mxu0 %v418
      %460 = vmatpush.bf16.msra.mxu0 %v417
      %461 = vmatpush.bf16.msra.mxu0 %v416
      %462 = vmatpush.bf16.msra.mxu0 %v415
      %463 = vmatpush.bf16.msra.mxu0 %v414
      %464 = vmatpush.bf16.msra.mxu0 %v413
      %465 = vmatpush.bf16.msra.mxu0 %v412
      %466 = vmatpush.bf16.msra.mxu0 %v411
      %467 = vmatmul.bf16.gmra.mxu0 %v264
      %v468 = vpop.f32.mrf.mxu0
      %v469 = vadd.f32 0.0, %v468
      %v470 = vpop.f32.mrf.mxu0
      %471 = vdwg.mxu0
      %472 = vmatpush.bf16.msra.mxu0 %v426
      %473 = vmatpush.bf16.msra.mxu0 %v425
      %474 = vmatpush.bf16.msra.mxu0 %v424
      %475 = vmatpush.bf16.msra.mxu0 %v423
      %476 = vmatpush.bf16.msra.mxu0 %v422
      %477 = vmatpush.bf16.msra.mxu0 %v421
      %478 = vmatpush.bf16.msra.mxu0 %v420
      %479 = vmatpush.bf16.msra.mxu0 %v419
      %480 = vmatmul.bf16.gmra.mxu0 %v265
      %v481 = vpop.f32.mrf.mxu0
      %v482 = vadd.f32 %v469, %v481
      %v483 = vpop.f32.mrf.mxu0
      %484 = vdwg.mxu0
      %485 = vmatpush.bf16.msra.mxu0 %v434
      %486 = vmatpush.bf16.msra.mxu0 %v433
      %487 = vmatpush.bf16.msra.mxu0 %v432
      %488 = vmatpush.bf16.msra.mxu0 %v431
      %489 = vmatpush.bf16.msra.mxu0 %v430
      %490 = vmatpush.bf16.msra.mxu0 %v429
      %491 = vmatpush.bf16.msra.mxu0 %v428
      %492 = vmatpush.bf16.msra.mxu0 %v427
      %493 = vmatmul.bf16.gmra.mxu0 %v266
      %v494 = vpop.f32.mrf.mxu0
      %v495 = vadd.f32 %v482, %v494
      %v496 = vpop.f32.mrf.mxu0
      %497 = vdwg.mxu0
      %v498 = vrot.slane %v495, 4
      %v499 = vadd.f32 %v495, %v498
      %v500 = vrot.slane %v499, 2
      %v501 = vadd.f32 %v499, %v500
      %v502 = vrot.slane %v501, 1
      %v503 = vadd.f32 %v501, %v502
      %v504 = vmul.f32 %v495, %v495
      %v505 = vrot.slane %v504, 4
      %v506 = vadd.f32 %v504, %v505
      %v507 = vrot.slane %v506, 2
      %v508 = vadd.f32 %v506, %v507
      %v509 = vrot.slane %v508, 1
      %v510 = vadd.f32 %v508, %v509
      %vm511 = vcmask 1040384
      %v512 = vsel %vm511, %v503, %v510
      %513 = vst [vmem:[%s230] sm:$0x3] %v512
      %v514 = vpack.c.bf16 %v495, %v495
      %515 = vst [vmem:[%s226] sm:$0xf] %v514
      %p516 = scmp.lt.s32.totalorder %s17, 1
      %s517 = scalar_select %p516, %s17, 1
      %s518 = smul.addr %s517, 4
      %s519 = scalar_lea.vmem %s4, %s518
      %p520 = scmp.lt.s32.totalorder %s17, 1
      %s521 = scalar_select %p520, %s17, 1
      %s522 = smul.addr %s521, 2
      %s523 = scalar_lea.vmem %s5, %s522
      // Predicated region
      $region37: #{_forward_impl.4} parent=35 // pred_check
        %p524 = pneg %p124
      $region38: #{_forward_impl.4} parent=35 // pred_check_branch
        %526 = sbr.rel (%p524) target = $region40
      $region39: #{_forward_impl.4} parent=35 // pred_region
        _
      $region40: #{_forward_impl.4} parent=35 // pred_fallthru
        _
      // Predicated region
      $region41: #{_forward_impl.4} parent=35 // pred_check
        %p527 = pneg %p150
      $region42: #{_forward_impl.4} parent=35 // pred_check_branch
        %529 = sbr.rel (%p527) target = $region44
      $region43: #{_forward_impl.4} parent=35 // pred_region
        _
      $region44: #{_forward_impl.4} parent=35 // pred_fallthru
        _
    $region36: #{_forward_impl.4} parent=5 // pred_fallthru
      _
    %p530 = scmp.le.s32.totalorder 2, %s12
    // Predicated region
    $region45: #{_forward_impl.4} parent=5 // pred_check
      %p531 = pneg %p530
    $region46: #{_forward_impl.4} parent=5 // pred_check_branch
      %533 = sbr.rel (%p531) target = $region48
    $region47: #{_forward_impl.4} parent=5 // pred_region
      %s534 = ssub.s32 %s12, 2
      // Predicated region
      $region49: #{_forward_impl.4} parent=47 // pred_check
        %p535 = pneg %p130
      $region50: #{_forward_impl.4} parent=47 // pred_check_branch
        %537 = sbr.rel (%p535) target = $region52
      $region51: #{_forward_impl.4} parent=47 // pred_region
        %p538 = scmp.lt.s32.totalorder %s18, 1
        %s539 = scalar_select %p538, %s18, 1
        %s540 = smul.addr %s539, 4
        %s541 = scalar_lea.vmem %s4, %s540
      $region52: #{_forward_impl.4} parent=47 // pred_fallthru
        _
      // Predicated region
      $region53: #{_forward_impl.4} parent=47 // pred_check
        %p542 = pneg %p156
      $region54: #{_forward_impl.4} parent=47 // pred_check_branch
        %544 = sbr.rel (%p542) target = $region56
      $region55: #{_forward_impl.4} parent=47 // pred_region
        %p545 = scmp.lt.s32.totalorder %s18, 1
        %s546 = scalar_select %p545, %s18, 1
        %s547 = smul.addr %s546, 2
        %s548 = scalar_lea.vmem %s5, %s547
      $region56: #{_forward_impl.4} parent=47 // pred_fallthru
        _
    $region48: #{_forward_impl.4} parent=5 // pred_fallthru
      _
  $region6: #{_forward_impl.4} parent=0 // loop_footer
    %s16 = sadd.s32 1, %s12
  $region7: #{_forward_impl.4} parent=0 // loop_footer_branch
    %11 = sbr.rel target = $region3
  $region8: #{_forward_impl.4} parent=0 // loop_exit
    _

</llo_original>
